<compile_context>
chip_gen: v7x
topology: tpu7x:2x2x1
jax: 0.10.0
libtpu: 0.0.40
codegen_flags: <defaults>
</compile_context>

<pallas_src>
import functools

import jax
import jax.numpy as jnp
from jax import lax
from jax.experimental import pallas as pl
from jax.experimental.pallas import tpu as pltpu

_LANE = 128
_SUBLANE = 8
_MAX_TOKEN_TILE = 512
_RESIDENT_WEIGHT_LIMIT = 12 * 1024 * 1024   # bytes; above this, stream layers


def _round_up(n, m):
    return ((n + m - 1) // m) * m


# ---------------------------------------------------------------------------
# Shared kernel math
# ---------------------------------------------------------------------------
def _ln_hat(v, eps):
    # Centered (two-pass) variance: avoids E[x^2]-E[x]^2 cancellation.
    mean = jnp.mean(v, axis=-1, keepdims=True)
    vc = v - mean
    var = jnp.mean(vc * vc, axis=-1, keepdims=True)
    return vc * lax.rsqrt(var + eps)


def _adapter_layer(x, w1, b1, w2, b2, eps):
    """x -> x + act(LNhat(x) @ W1' + b1') @ W2 + b2 (gamma/beta folded in W1'/b1')."""
    xn = _ln_hat(x, eps)
    h = jnp.dot(xn.astype(w1.dtype), w1, preferred_element_type=jnp.float32) + b1
    # TODO(synk): module's `activation` is a config Callable; tanh-approx GELU
    # is implemented here (swap to approximate=False for exact erf-GELU).
    h = jax.nn.gelu(h, approximate=True)
    y = jnp.dot(h.astype(w2.dtype), w2, preferred_element_type=jnp.float32) + b2
    return x + y


def _finalize(x, x_in_ref, fgamma, fbeta, eps, alpha, out_dtype):
    # exp(final_amp) is pre-folded into fgamma/fbeta.
    y = _ln_hat(x, eps) * fgamma + fbeta
    # Re-read the original tile from the (still resident) VMEM input buffer
    # instead of keeping an x0 copy live across the whole layer stack.
    x0 = x_in_ref[...].astype(jnp.float32)
    return (x0 * (1.0 - alpha) + y * alpha).astype(out_dtype)


# ---------------------------------------------------------------------------
# Kernel 1: all layers' weights resident in VMEM (small adapters).
# ---------------------------------------------------------------------------
def _resident_kernel(x_ref, w1s_ref, b1s_ref, w2s_ref, b2s_ref,
                     fgamma_ref, fbeta_ref, out_ref, *, eps, alpha, n_layers):
    x = x_ref[...].astype(jnp.float32)
    for l in range(n_layers):                       # static unroll (small L)
        x = _adapter_layer(x, w1s_ref[l], b1s_ref[l], w2s_ref[l], b2s_ref[l], eps)
    out_ref[...] = _finalize(x, x_ref, fgamma_ref[...], fbeta_ref[...],
                             eps, alpha, out_ref.dtype)


# ---------------------------------------------------------------------------
# Kernel 2: layer axis on the grid ("arbitrary"), weights streamed per layer,
# activation kept in a VMEM scratch accumulator (large adapters / v7x).
# ---------------------------------------------------------------------------
def _layer_grid_kernel(x_ref, w1_ref, b1_ref, w2_ref, b2_ref,
                       fgamma_ref, fbeta_ref, out_ref, x_acc, *, eps, alpha):
    l = pl.program_id(1)

    @pl.when(l == 0)
    def _():
        x_acc[...] = x_ref[...].astype(jnp.float32)

    x_acc[...] = _adapter_layer(x_acc[...], w1_ref[0], b1_ref[0],
                                w2_ref[0], b2_ref[0], eps)

    @pl.when(l == pl.num_programs(1) - 1)
    def _():
        out_ref[...] = _finalize(x_acc[...], x_ref, fgamma_ref[...],
                                 fbeta_ref[...], eps, alpha, out_ref.dtype)


# ---------------------------------------------------------------------------
# One-time parameter prep: fold LN affines / exp(final_amp), pad hidden axis,
# cast matmul weights to bf16, stack per-layer tensors.
# ---------------------------------------------------------------------------
def prepare_adapter_params(params):
    n_embed = params["final_ln_gamma"].shape[0]
    hidden = params["layers"][0]["w1"].shape[1]
    h_pad = _round_up(hidden, _LANE)
    dh = h_pad - hidden

    w1s, b1s, w2s, b2s = [], [], [], []
    for layer in params["layers"]:
        g, b = layer["ln_gamma"], layer["ln_beta"]
        w1 = g[:, None] * layer["w1"]                 # fold LN gamma into W1
        b1 = b @ layer["w1"] + layer["b1"]            # fold LN beta into b1
        # Padded hidden columns have zero weight/bias -> gelu(0)=0 exactly,
        # and the corresponding w2 rows are zero, so padding is exact.
        w1s.append(jnp.pad(w1, ((0, 0), (0, dh))).astype(jnp.bfloat16))
        b1s.append(jnp.pad(b1, (0, dh))[None, :].astype(jnp.float32))
        w2s.append(jnp.pad(layer["w2"], ((0, dh), (0, 0))).astype(jnp.bfloat16))
        b2s.append(layer["b2"][None, :].astype(jnp.float32))

    amp = jnp.exp(params["final_amp"][0].astype(jnp.float32))
    fgamma = (params["final_ln_gamma"] * amp)[None, :].astype(jnp.float32)
    fbeta = (params["final_ln_beta"] * amp)[None, :].astype(jnp.float32)

    return dict(
        w1s=jnp.stack(w1s),            # (L, E, H_pad) bf16
        b1s=jnp.stack(b1s),            # (L, 1, H_pad) f32
        w2s=jnp.stack(w2s),            # (L, H_pad, E) bf16
        b2s=jnp.stack(b2s),            # (L, 1, E)     f32
        final_gamma=fgamma,            # (1, E) f32, exp(amp) folded
        final_beta=fbeta,              # (1, E) f32, exp(amp) folded
        n_embed=n_embed, hidden=hidden, h_pad=h_pad,
    )


# ---------------------------------------------------------------------------
# Tiling / device heuristics
# ---------------------------------------------------------------------------
def _is_multi_tensorcore():
    try:
        kind = str(jax.devices()[0].device_kind).lower()
        return ("v7" in kind) or ("7x" in kind)
    except Exception:
        return False


def _token_tile(n_tokens, multi_core):
    tile = max(_SUBLANE, _round_up(min(n_tokens, _MAX_TOKEN_TILE), _SUBLANE))
    if multi_core and n_tokens > _SUBLANE:
        # Keep >= 2 grid steps only where a 2nd TensorCore exists (v7x); on
        # 1-TC chips (v5e/v6e) fewer, bigger tiles amortize per-step overhead.
        half = max(_SUBLANE, _round_up(pl.cdiv(n_tokens, 2), _SUBLANE))
        tile = min(tile, half)
    return tile


def _const_index_map(ndim):
    zeros = (0,) * ndim
    return lambda i: zeros


# ---------------------------------------------------------------------------
# Forward wrapper
# ---------------------------------------------------------------------------
def embedding_adapter_forward(x, prepared, *, eps, alpha, path=None):
    """x: (B, S, E) float32.  Inference-mode forward of EmbeddingAdapter."""
    b, s, e = x.shape
    assert e == prepared["n_embed"]
    n = b * s
    x_flat = x.reshape(n, e)                     # free reshape, no copy

    n_layers = prepared["w1s"].shape[0]
    h_pad = prepared["h_pad"]

    weight_bytes = ((prepared["w1s"].size + prepared["w2s"].size) * 2
                    + (prepared["b1s"].size + prepared["b2s"].size) * 4
                    + (prepared["final_gamma"].size + prepared["final_beta"].size) * 4)
    if path is None:
        path = "resident" if weight_bytes <= _RESIDENT_WEIGHT_LIMIT else "layer_grid"

    multi_core = _is_multi_tensorcore()
    tm = _token_tile(n, multi_core)
    grid_m = pl.cdiv(n, tm)    # ragged last tile: rows are independent, stores masked

    # VMEM budget from the real footprint, capped at 48 MiB so v7x (64 MiB
    # physical) keeps headroom; v5e/v6e (128 MiB physical) are unaffected.
    act_tile = tm * e * 4
    h_tile = tm * h_pad * 4
    w_vmem = weight_bytes if path == "resident" \
        else 2 * (weight_bytes // max(n_layers, 1))
    est = w_vmem + 4 * act_tile + 2 * h_tile + act_tile
    vmem_limit = int(min(48 * 1024 * 1024, max(32 * 1024 * 1024, 2 * est)))

    args = (x_flat, prepared["w1s"], prepared["b1s"], prepared["w2s"],
            prepared["b2s"], prepared["final_gamma"], prepared["final_beta"])

    if path == "resident":
        kernel = functools.partial(_resident_kernel, eps=eps, alpha=alpha,
                                   n_layers=n_layers)

        def build(single_buffer_weights):
            def const_spec(arr):
                shape = arr.shape
                if single_buffer_weights:
                    return pl.BlockSpec(shape, _const_index_map(len(shape)),
                                        pipeline_mode=pl.Buffered(1))
                return pl.BlockSpec(shape, _const_index_map(len(shape)))

            return pl.pallas_call(
                kernel,
                out_shape=jax.ShapeDtypeStruct((n, e), x.dtype),
                grid_spec=pltpu.PrefetchScalarGridSpec(
                    num_scalar_prefetch=0,
                    grid=(grid_m,),
                    in_specs=[
                        pl.BlockSpec((tm, e), lambda i: (i, 0)),   # x token tile
                        const_spec(prepared["w1s"]),
                        const_spec(prepared["b1s"]),
                        const_spec(prepared["w2s"]),
                        const_spec(prepared["b2s"]),
                        const_spec(prepared["final_gamma"]),
                        const_spec(prepared["final_beta"]),
                    ],
                    out_specs=pl.BlockSpec((tm, e), lambda i: (i, 0)),
                ),
                compiler_params=pltpu.CompilerParams(
                    dimension_semantics=("parallel",),
                    vmem_limit_bytes=vmem_limit,
                ),
            )

        try:
            out = build(True)(*args)      # weights single-buffered (Buffered(1))
        except Exception:
            # pipeline_mode=Buffered(1) unsupported on this jax build: fall
            # back to default (double-buffered) weight pipelining.
            out = build(False)(*args)
    else:
        # TODO(synk): for layers whose single-layer weights exceed VMEM, also
        # tile the hidden axis; not needed for the configs exercised here.
        kernel = functools.partial(_layer_grid_kernel, eps=eps, alpha=alpha)
        out = pl.pallas_call(
            kernel,
            out_shape=jax.ShapeDtypeStruct((n, e), x.dtype),
            grid_spec=pltpu.PrefetchScalarGridSpec(
                num_scalar_prefetch=0,
                grid=(grid_m, n_layers),
                in_specs=[
                    pl.BlockSpec((tm, e), lambda i, l: (i, 0)),        # x (resident across l)
                    pl.BlockSpec((1, e, h_pad), lambda i, l: (l, 0, 0)),  # W1'_l
                    pl.BlockSpec((1, 1, h_pad), lambda i, l: (l, 0, 0)),  # b1'_l
                    pl.BlockSpec((1, h_pad, e), lambda i, l: (l, 0, 0)),  # W2_l
                    pl.BlockSpec((1, 1, e), lambda i, l: (l, 0, 0)),      # b2_l
                    pl.BlockSpec((1, e), lambda i, l: (0, 0)),            # gamma_f*exp(amp)
                    pl.BlockSpec((1, e), lambda i, l: (0, 0)),            # beta_f*exp(amp)
                ],
                out_specs=pl.BlockSpec((tm, e), lambda i, l: (i, 0)),
                scratch_shapes=[pltpu.VMEM((tm, e), jnp.float32)],
            ),
            compiler_params=pltpu.CompilerParams(
                dimension_semantics=("parallel", "arbitrary"),
                vmem_limit_bytes=vmem_limit,
            ),
        )(*args)

    return out.reshape(b, s, e)


# ---------------------------------------------------------------------------
# Deterministic parameter construction (synthetic; matches module shapes)
# ---------------------------------------------------------------------------
def init_params(key, *, n_layers, n_embed, linear_size_multiplier, init_std):
    hidden = n_embed * linear_size_multiplier
    layers = []
    for _ in range(n_layers):
        k1, k2, k3, k4, k5, k6, key = jax.random.split(key, 7)
        layers.append(dict(
            ln_gamma=1.0 + 0.1 * jax.random.normal(k3, (n_embed,), jnp.float32),
            ln_beta=0.1 * jax.random.normal(k4, (n_embed,), jnp.float32),
            w1=jax.random.normal(k1, (n_embed, hidden), jnp.float32) * init_std,
            b1=0.05 * jax.random.normal(k5, (hidden,), jnp.float32),
            w2=jax.random.normal(k2, (hidden, n_embed), jnp.float32) * init_std,
            b2=0.05 * jax.random.normal(k6, (n_embed,), jnp.float32),
        ))
    kg, kb, ka = jax.random.split(key, 3)
    return dict(
        layers=layers,
        final_ln_gamma=1.0 + 0.1 * jax.random.normal(kg, (n_embed,), jnp.float32),
        final_ln_beta=0.1 * jax.random.normal(kb, (n_embed,), jnp.float32),
        final_amp=0.1 * jax.random.normal(ka, (1,), jnp.float32),
    )


# ---------------------------------------------------------------------------
# Pure-JAX reference (f32 weights) for a correctness check.
# ---------------------------------------------------------------------------
def _ref_forward(x, params, *, eps, alpha):
    def ln(v, g, b):
        m = jnp.mean(v, axis=-1, keepdims=True)
        var = jnp.mean((v - m) ** 2, axis=-1, keepdims=True)
        return (v - m) / jnp.sqrt(var + eps) * g + b

    orig = x
    for layer in params["layers"]:
        h = ln(x, layer["ln_gamma"], layer["ln_beta"])
        h = jax.nn.gelu(h @ layer["w1"] + layer["b1"], approximate=True)
        x = x + (h @ layer["w2"] + layer["b2"])
    x = ln(x, params["final_ln_gamma"], params["final_ln_beta"])
    x = x * jnp.exp(params["final_amp"][0])
    return orig * (1.0 - alpha) + x * alpha


# ---------------------------------------------------------------------------
if __name__ == "__main__":
    n_layers = 2
    n_embed = 32
    linear_size_multiplier = 3          # hidden=96 -> exercises hidden-axis padding
    init_std = 0.02
    ln_eps = 1e-5
    inference_alpha = 0.25
    batch, seq = 2, 8

    key = jax.random.PRNGKey(0)
    kx, kp = jax.random.split(key)
    x = jax.random.normal(kx, (batch, seq, n_embed), jnp.float32)
    params = init_params(kp, n_layers=n_layers, n_embed=n_embed,
                         linear_size_multiplier=linear_size_multiplier,
                         init_std=init_std)

    prepared = prepare_adapter_params(params)
    ref = _ref_forward(x, params, eps=ln_eps, alpha=inference_alpha)

    # Exercise both pipeline structures (auto-selection would pick "resident"
    # for this tiny config; "layer_grid" is the large-adapter / v7x path).
    for path in ("resident", "layer_grid"):
        out = embedding_adapter_forward(x, prepared, eps=ln_eps,
                                        alpha=inference_alpha, path=path)
        out = jax.block_until_ready(out)
        assert out.shape == x.shape and out.dtype == x.dtype, path
        # Tolerance reflects the intentional bf16-weight / f32-accumulate
        # precision contract of the kernel matmuls.
        assert jnp.allclose(out, ref, atol=5e-3, rtol=5e-3), path

    print("KERNEL_OK")
</pallas_src>

<mosaic_0001>
module attributes {stable_mosaic.version = 11 : i64} {
  func.func @_resident_kernel(%arg0: i32, %arg1: memref<16x32xf32, #tpu.memory_space<vmem>>, %arg2: memref<2x32x128xbf16, #tpu.memory_space<vmem>>, %arg3: memref<2x1x128xf32, #tpu.memory_space<vmem>>, %arg4: memref<2x128x32xbf16, #tpu.memory_space<vmem>>, %arg5: memref<2x1x32xf32, #tpu.memory_space<vmem>>, %arg6: memref<1x32xf32, #tpu.memory_space<vmem>>, %arg7: memref<1x32xf32, #tpu.memory_space<vmem>>, %arg8: memref<16x32xf32, #tpu.memory_space<vmem>>) attributes {dimension_semantics = [#tpu.dimension_semantics<parallel>], iteration_bounds = array<i64: 1>, scalar_prefetch = 0 : i64, scratch_operands = 0 : i64, tpu.core_type = #tpu.core_type<tc>, window_params = [{transform_indices = @transform_0, window_bounds = array<i64: 16, 32>}, {pipeline_mode = #tpu.pipeline_mode<synchronous>, transform_indices = @transform_1, window_bounds = array<i64: 2, 32, 128>}, {pipeline_mode = #tpu.pipeline_mode<synchronous>, transform_indices = @transform_2, window_bounds = array<i64: 2, 1, 128>}, {pipeline_mode = #tpu.pipeline_mode<synchronous>, transform_indices = @transform_3, window_bounds = array<i64: 2, 128, 32>}, {pipeline_mode = #tpu.pipeline_mode<synchronous>, transform_indices = @transform_4, window_bounds = array<i64: 2, 1, 32>}, {pipeline_mode = #tpu.pipeline_mode<synchronous>, transform_indices = @transform_5, window_bounds = array<i64: 1, 32>}, {pipeline_mode = #tpu.pipeline_mode<synchronous>, transform_indices = @transform_6, window_bounds = array<i64: 1, 32>}, {transform_indices = @transform_7, window_bounds = array<i64: 16, 32>}]} {
    %c0 = arith.constant 0 : index
    %c0_0 = arith.constant 0 : index
    %0 = vector.load %arg1[%c0, %c0_0] : memref<16x32xf32, #tpu.memory_space<vmem>>, vector<16x32xf32>
    %c0_1 = arith.constant 0 : index
    %c0_2 = arith.constant 0 : index
    %c0_3 = arith.constant 0 : index
    %1 = vector.load %arg2[%c0_1, %c0_2, %c0_3] : memref<2x32x128xbf16, #tpu.memory_space<vmem>>, vector<1x32x128xbf16>
    %2 = vector.shape_cast %1 : vector<1x32x128xbf16> to vector<32x128xbf16>
    %c0_4 = arith.constant 0 : index
    %c0_5 = arith.constant 0 : index
    %c0_6 = arith.constant 0 : index
    %3 = vector.load %arg3[%c0_4, %c0_5, %c0_6] : memref<2x1x128xf32, #tpu.memory_space<vmem>>, vector<1x1x128xf32>
    %4 = vector.shape_cast %3 : vector<1x1x128xf32> to vector<1x128xf32>
    %c0_7 = arith.constant 0 : index
    %c0_8 = arith.constant 0 : index
    %c0_9 = arith.constant 0 : index
    %5 = vector.load %arg4[%c0_7, %c0_8, %c0_9] : memref<2x128x32xbf16, #tpu.memory_space<vmem>>, vector<1x128x32xbf16>
    %6 = vector.shape_cast %5 : vector<1x128x32xbf16> to vector<128x32xbf16>
    %c0_10 = arith.constant 0 : index
    %c0_11 = arith.constant 0 : index
    %c0_12 = arith.constant 0 : index
    %7 = vector.load %arg5[%c0_10, %c0_11, %c0_12] : memref<2x1x32xf32, #tpu.memory_space<vmem>>, vector<1x1x32xf32>
    %8 = vector.shape_cast %7 : vector<1x1x32xf32> to vector<1x32xf32>
    %cst = arith.constant dense<0.000000e+00> : vector<16xf32>
    %9 = vector.multi_reduction <add>, %0, %cst [1] : vector<16x32xf32> to vector<16xf32>
    %10 = vector.shape_cast %9 : vector<16xf32> to vector<16x1xf32>
    %cst_13 = arith.constant 3.200000e+01 : f32
    %11 = vector.broadcast %cst_13 : f32 to vector<16x1xf32>
    %12 = arith.divf %10, %11 : vector<16x1xf32>
    %13 = vector.broadcast %12 : vector<16x1xf32> to vector<16x32xf32>
    %14 = arith.subf %0, %13 : vector<16x32xf32>
    %15 = arith.mulf %14, %14 : vector<16x32xf32>
    %cst_14 = arith.constant dense<0.000000e+00> : vector<16xf32>
    %16 = vector.multi_reduction <add>, %15, %cst_14 [1] : vector<16x32xf32> to vector<16xf32>
    %17 = vector.shape_cast %16 : vector<16xf32> to vector<16x1xf32>
    %cst_15 = arith.constant 3.200000e+01 : f32
    %18 = vector.broadcast %cst_15 : f32 to vector<16x1xf32>
    %19 = arith.divf %17, %18 : vector<16x1xf32>
    %cst_16 = arith.constant 9.99999974E-6 : f32
    %20 = vector.broadcast %cst_16 : f32 to vector<16x1xf32>
    %21 = arith.addf %19, %20 : vector<16x1xf32>
    %22 = math.rsqrt %21 : vector<16x1xf32>
    %23 = vector.broadcast %22 : vector<16x1xf32> to vector<16x32xf32>
    %24 = arith.mulf %14, %23 : vector<16x32xf32>
    %25 = arith.truncf %24 : vector<16x32xf32> to vector<16x32xbf16>
    %cst_17 = arith.constant dense<0.000000e+00> : vector<16x128xf32>
    %26 = tpu.matmul %25, %2, %cst_17 {dimension_numbers = #tpu.dot_dimension_numbers<[1], [0], [0], [1], [0, 0, 1, 1], [], []>} : vector<16x32xbf16>, vector<32x128xbf16>, vector<16x128xf32> -> vector<16x128xf32>
    %27 = vector.broadcast %4 : vector<1x128xf32> to vector<16x128xf32>
    %28 = arith.addf %26, %27 : vector<16x128xf32>
    %29 = arith.mulf %28, %28 : vector<16x128xf32>
    %30 = arith.mulf %28, %29 : vector<16x128xf32>
    %cst_18 = arith.constant 4.471500e-02 : f32
    %31 = vector.broadcast %cst_18 : f32 to vector<16x128xf32>
    %32 = arith.mulf %31, %30 : vector<16x128xf32>
    %33 = arith.addf %28, %32 : vector<16x128xf32>
    %cst_19 = arith.constant 0.797884583 : f32
    %34 = vector.broadcast %cst_19 : f32 to vector<16x128xf32>
    %35 = arith.mulf %34, %33 : vector<16x128xf32>
    %36 = math.tanh %35 : vector<16x128xf32>
    %cst_20 = arith.constant 1.000000e+00 : f32
    %37 = vector.broadcast %cst_20 : f32 to vector<16x128xf32>
    %38 = arith.addf %37, %36 : vector<16x128xf32>
    %cst_21 = arith.constant 5.000000e-01 : f32
    %39 = vector.broadcast %cst_21 : f32 to vector<16x128xf32>
    %40 = arith.mulf %39, %38 : vector<16x128xf32>
    %41 = arith.mulf %28, %40 : vector<16x128xf32>
    %42 = arith.truncf %41 : vector<16x128xf32> to vector<16x128xbf16>
    %cst_22 = arith.constant dense<0.000000e+00> : vector<16x32xf32>
    %43 = tpu.matmul %42, %6, %cst_22 {dimension_numbers = #tpu.dot_dimension_numbers<[1], [0], [0], [1], [0, 0, 1, 1], [], []>} : vector<16x128xbf16>, vector<128x32xbf16>, vector<16x32xf32> -> vector<16x32xf32>
    %44 = vector.broadcast %8 : vector<1x32xf32> to vector<16x32xf32>
    %45 = arith.addf %43, %44 : vector<16x32xf32>
    %46 = arith.addf %0, %45 : vector<16x32xf32>
    %c1 = arith.constant 1 : index
    %c0_23 = arith.constant 0 : index
    %c0_24 = arith.constant 0 : index
    %47 = vector.load %arg2[%c1, %c0_23, %c0_24] : memref<2x32x128xbf16, #tpu.memory_space<vmem>>, vector<1x32x128xbf16>
    %48 = vector.shape_cast %47 : vector<1x32x128xbf16> to vector<32x128xbf16>
    %c1_25 = arith.constant 1 : index
    %c0_26 = arith.constant 0 : index
    %c0_27 = arith.constant 0 : index
    %49 = vector.load %arg3[%c1_25, %c0_26, %c0_27] : memref<2x1x128xf32, #tpu.memory_space<vmem>>, vector<1x1x128xf32>
    %50 = vector.shape_cast %49 : vector<1x1x128xf32> to vector<1x128xf32>
    %c1_28 = arith.constant 1 : index
    %c0_29 = arith.constant 0 : index
    %c0_30 = arith.constant 0 : index
    %51 = vector.load %arg4[%c1_28, %c0_29, %c0_30] : memref<2x128x32xbf16, #tpu.memory_space<vmem>>, vector<1x128x32xbf16>
    %52 = vector.shape_cast %51 : vector<1x128x32xbf16> to vector<128x32xbf16>
    %c1_31 = arith.constant 1 : index
    %c0_32 = arith.constant 0 : index
    %c0_33 = arith.constant 0 : index
    %53 = vector.load %arg5[%c1_31, %c0_32, %c0_33] : memref<2x1x32xf32, #tpu.memory_space<vmem>>, vector<1x1x32xf32>
    %54 = vector.shape_cast %53 : vector<1x1x32xf32> to vector<1x32xf32>
    %cst_34 = arith.constant dense<0.000000e+00> : vector<16xf32>
    %55 = vector.multi_reduction <add>, %46, %cst_34 [1] : vector<16x32xf32> to vector<16xf32>
    %56 = vector.shape_cast %55 : vector<16xf32> to vector<16x1xf32>
    %cst_35 = arith.constant 3.200000e+01 : f32
    %57 = vector.broadcast %cst_35 : f32 to vector<16x1xf32>
    %58 = arith.divf %56, %57 : vector<16x1xf32>
    %59 = vector.broadcast %58 : vector<16x1xf32> to vector<16x32xf32>
    %60 = arith.subf %46, %59 : vector<16x32xf32>
    %61 = arith.mulf %60, %60 : vector<16x32xf32>
    %cst_36 = arith.constant dense<0.000000e+00> : vector<16xf32>
    %62 = vector.multi_reduction <add>, %61, %cst_36 [1] : vector<16x32xf32> to vector<16xf32>
    %63 = vector.shape_cast %62 : vector<16xf32> to vector<16x1xf32>
    %cst_37 = arith.constant 3.200000e+01 : f32
    %64 = vector.broadcast %cst_37 : f32 to vector<16x1xf32>
    %65 = arith.divf %63, %64 : vector<16x1xf32>
    %cst_38 = arith.constant 9.99999974E-6 : f32
    %66 = vector.broadcast %cst_38 : f32 to vector<16x1xf32>
    %67 = arith.addf %65, %66 : vector<16x1xf32>
    %68 = math.rsqrt %67 : vector<16x1xf32>
    %69 = vector.broadcast %68 : vector<16x1xf32> to vector<16x32xf32>
    %70 = arith.mulf %60, %69 : vector<16x32xf32>
    %71 = arith.truncf %70 : vector<16x32xf32> to vector<16x32xbf16>
    %cst_39 = arith.constant dense<0.000000e+00> : vector<16x128xf32>
    %72 = tpu.matmul %71, %48, %cst_39 {dimension_numbers = #tpu.dot_dimension_numbers<[1], [0], [0], [1], [0, 0, 1, 1], [], []>} : vector<16x32xbf16>, vector<32x128xbf16>, vector<16x128xf32> -> vector<16x128xf32>
    %73 = vector.broadcast %50 : vector<1x128xf32> to vector<16x128xf32>
    %74 = arith.addf %72, %73 : vector<16x128xf32>
    %75 = arith.mulf %74, %74 : vector<16x128xf32>
    %76 = arith.mulf %74, %75 : vector<16x128xf32>
    %cst_40 = arith.constant 4.471500e-02 : f32
    %77 = vector.broadcast %cst_40 : f32 to vector<16x128xf32>
    %78 = arith.mulf %77, %76 : vector<16x128xf32>
    %79 = arith.addf %74, %78 : vector<16x128xf32>
    %cst_41 = arith.constant 0.797884583 : f32
    %80 = vector.broadcast %cst_41 : f32 to vector<16x128xf32>
    %81 = arith.mulf %80, %79 : vector<16x128xf32>
    %82 = math.tanh %81 : vector<16x128xf32>
    %cst_42 = arith.constant 1.000000e+00 : f32
    %83 = vector.broadcast %cst_42 : f32 to vector<16x128xf32>
    %84 = arith.addf %83, %82 : vector<16x128xf32>
    %cst_43 = arith.constant 5.000000e-01 : f32
    %85 = vector.broadcast %cst_43 : f32 to vector<16x128xf32>
    %86 = arith.mulf %85, %84 : vector<16x128xf32>
    %87 = arith.mulf %74, %86 : vector<16x128xf32>
    %88 = arith.truncf %87 : vector<16x128xf32> to vector<16x128xbf16>
    %cst_44 = arith.constant dense<0.000000e+00> : vector<16x32xf32>
    %89 = tpu.matmul %88, %52, %cst_44 {dimension_numbers = #tpu.dot_dimension_numbers<[1], [0], [0], [1], [0, 0, 1, 1], [], []>} : vector<16x128xbf16>, vector<128x32xbf16>, vector<16x32xf32> -> vector<16x32xf32>
    %90 = vector.broadcast %54 : vector<1x32xf32> to vector<16x32xf32>
    %91 = arith.addf %89, %90 : vector<16x32xf32>
    %92 = arith.addf %46, %91 : vector<16x32xf32>
    %c0_45 = arith.constant 0 : index
    %c0_46 = arith.constant 0 : index
    %93 = vector.load %arg6[%c0_45, %c0_46] : memref<1x32xf32, #tpu.memory_space<vmem>>, vector<1x32xf32>
    %c0_47 = arith.constant 0 : index
    %c0_48 = arith.constant 0 : index
    %94 = vector.load %arg7[%c0_47, %c0_48] : memref<1x32xf32, #tpu.memory_space<vmem>>, vector<1x32xf32>
    %cst_49 = arith.constant dense<0.000000e+00> : vector<16xf32>
    %95 = vector.multi_reduction <add>, %92, %cst_49 [1] : vector<16x32xf32> to vector<16xf32>
    %96 = vector.shape_cast %95 : vector<16xf32> to vector<16x1xf32>
    %cst_50 = arith.constant 3.200000e+01 : f32
    %97 = vector.broadcast %cst_50 : f32 to vector<16x1xf32>
    %98 = arith.divf %96, %97 : vector<16x1xf32>
    %99 = vector.broadcast %98 : vector<16x1xf32> to vector<16x32xf32>
    %100 = arith.subf %92, %99 : vector<16x32xf32>
    %101 = arith.mulf %100, %100 : vector<16x32xf32>
    %cst_51 = arith.constant dense<0.000000e+00> : vector<16xf32>
    %102 = vector.multi_reduction <add>, %101, %cst_51 [1] : vector<16x32xf32> to vector<16xf32>
    %103 = vector.shape_cast %102 : vector<16xf32> to vector<16x1xf32>
    %cst_52 = arith.constant 3.200000e+01 : f32
    %104 = vector.broadcast %cst_52 : f32 to vector<16x1xf32>
    %105 = arith.divf %103, %104 : vector<16x1xf32>
    %cst_53 = arith.constant 9.99999974E-6 : f32
    %106 = vector.broadcast %cst_53 : f32 to vector<16x1xf32>
    %107 = arith.addf %105, %106 : vector<16x1xf32>
    %108 = math.rsqrt %107 : vector<16x1xf32>
    %109 = vector.broadcast %108 : vector<16x1xf32> to vector<16x32xf32>
    %110 = arith.mulf %100, %109 : vector<16x32xf32>
    %111 = vector.broadcast %93 : vector<1x32xf32> to vector<16x32xf32>
    %112 = arith.mulf %110, %111 : vector<16x32xf32>
    %113 = vector.broadcast %94 : vector<1x32xf32> to vector<16x32xf32>
    %114 = arith.addf %112, %113 : vector<16x32xf32>
    %c0_54 = arith.constant 0 : index
    %c0_55 = arith.constant 0 : index
    %115 = vector.load %arg1[%c0_54, %c0_55] : memref<16x32xf32, #tpu.memory_space<vmem>>, vector<16x32xf32>
    %cst_56 = arith.constant 7.500000e-01 : f32
    %116 = vector.broadcast %cst_56 : f32 to vector<16x32xf32>
    %117 = arith.mulf %115, %116 : vector<16x32xf32>
    %cst_57 = arith.constant 2.500000e-01 : f32
    %118 = vector.broadcast %cst_57 : f32 to vector<16x32xf32>
    %119 = arith.mulf %114, %118 : vector<16x32xf32>
    %120 = arith.addf %117, %119 : vector<16x32xf32>
    %c0_58 = arith.constant 0 : index
    %c0_59 = arith.constant 0 : index
    %121 = vector.load %arg8[%c0_58, %c0_59] : memref<16x32xf32, #tpu.memory_space<vmem>>, vector<16x32xf32>
    tpu.vector_store %arg8[%c0_58, %c0_59], %120 {strides = array<i32>} : memref<16x32xf32, #tpu.memory_space<vmem>>, vector<16x32xf32>,
    return
  }
  func.func @transform_0(%arg0: i32) -> (i32, i32) {
    %c0_i32 = arith.constant 0 : i32
    %c0_i32_0 = arith.constant 0 : i32
    return %arg0, %c0_i32 : i32, i32
  }
  func.func @transform_1(%arg0: i32) -> (i32, i32, i32) {
    %c0_i32 = arith.constant 0 : i32
    %c0_i32_0 = arith.constant 0 : i32
    %c0_i32_1 = arith.constant 0 : i32
    %c0_i32_2 = arith.constant 0 : i32
    return %c0_i32, %c0_i32_0, %c0_i32_1 : i32, i32, i32
  }
  func.func @transform_2(%arg0: i32) -> (i32, i32, i32) {
    %c0_i32 = arith.constant 0 : i32
    %c0_i32_0 = arith.constant 0 : i32
    %c0_i32_1 = arith.constant 0 : i32
    %c0_i32_2 = arith.constant 0 : i32
    return %c0_i32, %c0_i32_0, %c0_i32_1 : i32, i32, i32
  }
  func.func @transform_3(%arg0: i32) -> (i32, i32, i32) {
    %c0_i32 = arith.constant 0 : i32
    %c0_i32_0 = arith.constant 0 : i32
    %c0_i32_1 = arith.constant 0 : i32
    %c0_i32_2 = arith.constant 0 : i32
    return %c0_i32, %c0_i32_0, %c0_i32_1 : i32, i32, i32
  }
  func.func @transform_4(%arg0: i32) -> (i32, i32, i32) {
    %c0_i32 = arith.constant 0 : i32
    %c0_i32_0 = arith.constant 0 : i32
    %c0_i32_1 = arith.constant 0 : i32
    %c0_i32_2 = arith.constant 0 : i32
    return %c0_i32, %c0_i32_0, %c0_i32_1 : i32, i32, i32
  }
  func.func @transform_5(%arg0: i32) -> (i32, i32) {
    %c0_i32 = arith.constant 0 : i32
    %c0_i32_0 = arith.constant 0 : i32
    %c0_i32_1 = arith.constant 0 : i32
    return %c0_i32, %c0_i32_0 : i32, i32
  }
  func.func @transform_6(%arg0: i32) -> (i32, i32) {
    %c0_i32 = arith.constant 0 : i32
    %c0_i32_0 = arith.constant 0 : i32
    %c0_i32_1 = arith.constant 0 : i32
    return %c0_i32, %c0_i32_0 : i32, i32
  }
  func.func @transform_7(%arg0: i32) -> (i32, i32) {
    %c0_i32 = arith.constant 0 : i32
    %c0_i32_0 = arith.constant 0 : i32
    return %arg0, %c0_i32 : i32, i32
  }
}

module attributes {stable_mosaic.version = 11 : i64} {
  func.func @_resident_kernel(%arg0: i32, %arg1: memref<16x32xf32, #tpu.memory_space<vmem>>, %arg2: memref<2x32x128xbf16, #tpu.memory_space<vmem>>, %arg3: memref<2x1x128xf32, #tpu.memory_space<vmem>>, %arg4: memref<2x128x32xbf16, #tpu.memory_space<vmem>>, %arg5: memref<2x1x32xf32, #tpu.memory_space<vmem>>, %arg6: memref<1x32xf32, #tpu.memory_space<vmem>>, %arg7: memref<1x32xf32, #tpu.memory_space<vmem>>, %arg8: memref<16x32xf32, #tpu.memory_space<vmem>>) attributes {dimension_semantics = [#tpu.dimension_semantics<parallel>], iteration_bounds = array<i64: 1>, scalar_prefetch = 0 : i64, scratch_operands = 0 : i64, tpu.core_type = #tpu.core_type<tc>, window_params = [{transform_indices = @transform_0, window_bounds = array<i64: 16, 32>}, {pipeline_mode = #tpu.pipeline_mode<synchronous>, transform_indices = @transform_1, window_bounds = array<i64: 2, 32, 128>}, {pipeline_mode = #tpu.pipeline_mode<synchronous>, transform_indices = @transform_2, window_bounds = array<i64: 2, 1, 128>}, {pipeline_mode = #tpu.pipeline_mode<synchronous>, transform_indices = @transform_3, window_bounds = array<i64: 2, 128, 32>}, {pipeline_mode = #tpu.pipeline_mode<synchronous>, transform_indices = @transform_4, window_bounds = array<i64: 2, 1, 32>}, {pipeline_mode = #tpu.pipeline_mode<synchronous>, transform_indices = @transform_5, window_bounds = array<i64: 1, 32>}, {pipeline_mode = #tpu.pipeline_mode<synchronous>, transform_indices = @transform_6, window_bounds = array<i64: 1, 32>}, {transform_indices = @transform_7, window_bounds = array<i64: 16, 32>}]} {
    %c0 = arith.constant 0 : index
    %c0_0 = arith.constant 0 : index
    %0 = vector.load %arg1[%c0, %c0_0] : memref<16x32xf32, #tpu.memory_space<vmem>>, vector<16x32xf32>
    %c0_1 = arith.constant 0 : index
    %c0_2 = arith.constant 0 : index
    %c0_3 = arith.constant 0 : index
    %1 = vector.load %arg2[%c0_1, %c0_2, %c0_3] : memref<2x32x128xbf16, #tpu.memory_space<vmem>>, vector<1x32x128xbf16>
    %2 = vector.shape_cast %1 : vector<1x32x128xbf16> to vector<32x128xbf16>
    %c0_4 = arith.constant 0 : index
    %c0_5 = arith.constant 0 : index
    %c0_6 = arith.constant 0 : index
    %3 = vector.load %arg3[%c0_4, %c0_5, %c0_6] : memref<2x1x128xf32, #tpu.memory_space<vmem>>, vector<1x1x128xf32>
    %4 = vector.shape_cast %3 : vector<1x1x128xf32> to vector<1x128xf32>
    %c0_7 = arith.constant 0 : index
    %c0_8 = arith.constant 0 : index
    %c0_9 = arith.constant 0 : index
    %5 = vector.load %arg4[%c0_7, %c0_8, %c0_9] : memref<2x128x32xbf16, #tpu.memory_space<vmem>>, vector<1x128x32xbf16>
    %6 = vector.shape_cast %5 : vector<1x128x32xbf16> to vector<128x32xbf16>
    %c0_10 = arith.constant 0 : index
    %c0_11 = arith.constant 0 : index
    %c0_12 = arith.constant 0 : index
    %7 = vector.load %arg5[%c0_10, %c0_11, %c0_12] : memref<2x1x32xf32, #tpu.memory_space<vmem>>, vector<1x1x32xf32>
    %8 = vector.shape_cast %7 : vector<1x1x32xf32> to vector<1x32xf32>
    %cst = arith.constant dense<0.000000e+00> : vector<16xf32>
    %9 = vector.multi_reduction <add>, %0, %cst [1] : vector<16x32xf32> to vector<16xf32>
    %10 = vector.shape_cast %9 : vector<16xf32> to vector<16x1xf32>
    %cst_13 = arith.constant 3.200000e+01 : f32
    %11 = vector.broadcast %cst_13 : f32 to vector<16x1xf32>
    %12 = arith.divf %10, %11 : vector<16x1xf32>
    %13 = vector.broadcast %12 : vector<16x1xf32> to vector<16x32xf32>
    %14 = arith.subf %0, %13 : vector<16x32xf32>
    %15 = arith.mulf %14, %14 : vector<16x32xf32>
    %cst_14 = arith.constant dense<0.000000e+00> : vector<16xf32>
    %16 = vector.multi_reduction <add>, %15, %cst_14 [1] : vector<16x32xf32> to vector<16xf32>
    %17 = vector.shape_cast %16 : vector<16xf32> to vector<16x1xf32>
    %cst_15 = arith.constant 3.200000e+01 : f32
    %18 = vector.broadcast %cst_15 : f32 to vector<16x1xf32>
    %19 = arith.divf %17, %18 : vector<16x1xf32>
    %cst_16 = arith.constant 9.99999974E-6 : f32
    %20 = vector.broadcast %cst_16 : f32 to vector<16x1xf32>
    %21 = arith.addf %19, %20 : vector<16x1xf32>
    %22 = math.rsqrt %21 : vector<16x1xf32>
    %23 = vector.broadcast %22 : vector<16x1xf32> to vector<16x32xf32>
    %24 = arith.mulf %14, %23 : vector<16x32xf32>
    %25 = arith.truncf %24 : vector<16x32xf32> to vector<16x32xbf16>
    %cst_17 = arith.constant dense<0.000000e+00> : vector<16x128xf32>
    %26 = tpu.matmul %25, %2, %cst_17 {dimension_numbers = #tpu.dot_dimension_numbers<[1], [0], [0], [1], [0, 0, 1, 1], [], []>} : vector<16x32xbf16>, vector<32x128xbf16>, vector<16x128xf32> -> vector<16x128xf32>
    %27 = vector.broadcast %4 : vector<1x128xf32> to vector<16x128xf32>
    %28 = arith.addf %26, %27 : vector<16x128xf32>
    %29 = arith.mulf %28, %28 : vector<16x128xf32>
    %30 = arith.mulf %28, %29 : vector<16x128xf32>
    %cst_18 = arith.constant 4.471500e-02 : f32
    %31 = vector.broadcast %cst_18 : f32 to vector<16x128xf32>
    %32 = arith.mulf %31, %30 : vector<16x128xf32>
    %33 = arith.addf %28, %32 : vector<16x128xf32>
    %cst_19 = arith.constant 0.797884583 : f32
    %34 = vector.broadcast %cst_19 : f32 to vector<16x128xf32>
    %35 = arith.mulf %34, %33 : vector<16x128xf32>
    %36 = math.tanh %35 : vector<16x128xf32>
    %cst_20 = arith.constant 1.000000e+00 : f32
    %37 = vector.broadcast %cst_20 : f32 to vector<16x128xf32>
    %38 = arith.addf %37, %36 : vector<16x128xf32>
    %cst_21 = arith.constant 5.000000e-01 : f32
    %39 = vector.broadcast %cst_21 : f32 to vector<16x128xf32>
    %40 = arith.mulf %39, %38 : vector<16x128xf32>
    %41 = arith.mulf %28, %40 : vector<16x128xf32>
    %42 = arith.truncf %41 : vector<16x128xf32> to vector<16x128xbf16>
    %cst_22 = arith.constant dense<0.000000e+00> : vector<16x32xf32>
    %43 = tpu.matmul %42, %6, %cst_22 {dimension_numbers = #tpu.dot_dimension_numbers<[1], [0], [0], [1], [0, 0, 1, 1], [], []>} : vector<16x128xbf16>, vector<128x32xbf16>, vector<16x32xf32> -> vector<16x32xf32>
    %44 = vector.broadcast %8 : vector<1x32xf32> to vector<16x32xf32>
    %45 = arith.addf %43, %44 : vector<16x32xf32>
    %46 = arith.addf %0, %45 : vector<16x32xf32>
    %c1 = arith.constant 1 : index
    %c0_23 = arith.constant 0 : index
    %c0_24 = arith.constant 0 : index
    %47 = vector.load %arg2[%c1, %c0_23, %c0_24] : memref<2x32x128xbf16, #tpu.memory_space<vmem>>, vector<1x32x128xbf16>
    %48 = vector.shape_cast %47 : vector<1x32x128xbf16> to vector<32x128xbf16>
    %c1_25 = arith.constant 1 : index
    %c0_26 = arith.constant 0 : index
    %c0_27 = arith.constant 0 : index
    %49 = vector.load %arg3[%c1_25, %c0_26, %c0_27] : memref<2x1x128xf32, #tpu.memory_space<vmem>>, vector<1x1x128xf32>
    %50 = vector.shape_cast %49 : vector<1x1x128xf32> to vector<1x128xf32>
    %c1_28 = arith.constant 1 : index
    %c0_29 = arith.constant 0 : index
    %c0_30 = arith.constant 0 : index
    %51 = vector.load %arg4[%c1_28, %c0_29, %c0_30] : memref<2x128x32xbf16, #tpu.memory_space<vmem>>, vector<1x128x32xbf16>
    %52 = vector.shape_cast %51 : vector<1x128x32xbf16> to vector<128x32xbf16>
    %c1_31 = arith.constant 1 : index
    %c0_32 = arith.constant 0 : index
    %c0_33 = arith.constant 0 : index
    %53 = vector.load %arg5[%c1_31, %c0_32, %c0_33] : memref<2x1x32xf32, #tpu.memory_space<vmem>>, vector<1x1x32xf32>
    %54 = vector.shape_cast %53 : vector<1x1x32xf32> to vector<1x32xf32>
    %cst_34 = arith.constant dense<0.000000e+00> : vector<16xf32>
    %55 = vector.multi_reduction <add>, %46, %cst_34 [1] : vector<16x32xf32> to vector<16xf32>
    %56 = vector.shape_cast %55 : vector<16xf32> to vector<16x1xf32>
    %cst_35 = arith.constant 3.200000e+01 : f32
    %57 = vector.broadcast %cst_35 : f32 to vector<16x1xf32>
    %58 = arith.divf %56, %57 : vector<16x1xf32>
    %59 = vector.broadcast %58 : vector<16x1xf32> to vector<16x32xf32>
    %60 = arith.subf %46, %59 : vector<16x32xf32>
    %61 = arith.mulf %60, %60 : vector<16x32xf32>
    %cst_36 = arith.constant dense<0.000000e+00> : vector<16xf32>
    %62 = vector.multi_reduction <add>, %61, %cst_36 [1] : vector<16x32xf32> to vector<16xf32>
    %63 = vector.shape_cast %62 : vector<16xf32> to vector<16x1xf32>
    %cst_37 = arith.constant 3.200000e+01 : f32
    %64 = vector.broadcast %cst_37 : f32 to vector<16x1xf32>
    %65 = arith.divf %63, %64 : vector<16x1xf32>
    %cst_38 = arith.constant 9.99999974E-6 : f32
    %66 = vector.broadcast %cst_38 : f32 to vector<16x1xf32>
    %67 = arith.addf %65, %66 : vector<16x1xf32>
    %68 = math.rsqrt %67 : vector<16x1xf32>
    %69 = vector.broadcast %68 : vector<16x1xf32> to vector<16x32xf32>
    %70 = arith.mulf %60, %69 : vector<16x32xf32>
    %71 = arith.truncf %70 : vector<16x32xf32> to vector<16x32xbf16>
    %cst_39 = arith.constant dense<0.000000e+00> : vector<16x128xf32>
    %72 = tpu.matmul %71, %48, %cst_39 {dimension_numbers = #tpu.dot_dimension_numbers<[1], [0], [0], [1], [0, 0, 1, 1], [], []>} : vector<16x32xbf16>, vector<32x128xbf16>, vector<16x128xf32> -> vector<16x128xf32>
    %73 = vector.broadcast %50 : vector<1x128xf32> to vector<16x128xf32>
    %74 = arith.addf %72, %73 : vector<16x128xf32>
    %75 = arith.mulf %74, %74 : vector<16x128xf32>
    %76 = arith.mulf %74, %75 : vector<16x128xf32>
    %cst_40 = arith.constant 4.471500e-02 : f32
    %77 = vector.broadcast %cst_40 : f32 to vector<16x128xf32>
    %78 = arith.mulf %77, %76 : vector<16x128xf32>
    %79 = arith.addf %74, %78 : vector<16x128xf32>
    %cst_41 = arith.constant 0.797884583 : f32
    %80 = vector.broadcast %cst_41 : f32 to vector<16x128xf32>
    %81 = arith.mulf %80, %79 : vector<16x128xf32>
    %82 = math.tanh %81 : vector<16x128xf32>
    %cst_42 = arith.constant 1.000000e+00 : f32
    %83 = vector.broadcast %cst_42 : f32 to vector<16x128xf32>
    %84 = arith.addf %83, %82 : vector<16x128xf32>
    %cst_43 = arith.constant 5.000000e-01 : f32
    %85 = vector.broadcast %cst_43 : f32 to vector<16x128xf32>
    %86 = arith.mulf %85, %84 : vector<16x128xf32>
    %87 = arith.mulf %74, %86 : vector<16x128xf32>
    %88 = arith.truncf %87 : vector<16x128xf32> to vector<16x128xbf16>
    %cst_44 = arith.constant dense<0.000000e+00> : vector<16x32xf32>
    %89 = tpu.matmul %88, %52, %cst_44 {dimension_numbers = #tpu.dot_dimension_numbers<[1], [0], [0], [1], [0, 0, 1, 1], [], []>} : vector<16x128xbf16>, vector<128x32xbf16>, vector<16x32xf32> -> vector<16x32xf32>
    %90 = vector.broadcast %54 : vector<1x32xf32> to vector<16x32xf32>
    %91 = arith.addf %89, %90 : vector<16x32xf32>
    %92 = arith.addf %46, %91 : vector<16x32xf32>
    %c0_45 = arith.constant 0 : index
    %c0_46 = arith.constant 0 : index
    %93 = vector.load %arg6[%c0_45, %c0_46] : memref<1x32xf32, #tpu.memory_space<vmem>>, vector<1x32xf32>
    %c0_47 = arith.constant 0 : index
    %c0_48 = arith.constant 0 : index
    %94 = vector.load %arg7[%c0_47, %c0_48] : memref<1x32xf32, #tpu.memory_space<vmem>>, vector<1x32xf32>
    %cst_49 = arith.constant dense<0.000000e+00> : vector<16xf32>
    %95 = vector.multi_reduction <add>, %92, %cst_49 [1] : vector<16x32xf32> to vector<16xf32>
    %96 = vector.shape_cast %95 : vector<16xf32> to vector<16x1xf32>
    %cst_50 = arith.constant 3.200000e+01 : f32
    %97 = vector.broadcast %cst_50 : f32 to vector<16x1xf32>
    %98 = arith.divf %96, %97 : vector<16x1xf32>
    %99 = vector.broadcast %98 : vector<16x1xf32> to vector<16x32xf32>
    %100 = arith.subf %92, %99 : vector<16x32xf32>
    %101 = arith.mulf %100, %100 : vector<16x32xf32>
    %cst_51 = arith.constant dense<0.000000e+00> : vector<16xf32>
    %102 = vector.multi_reduction <add>, %101, %cst_51 [1] : vector<16x32xf32> to vector<16xf32>
    %103 = vector.shape_cast %102 : vector<16xf32> to vector<16x1xf32>
    %cst_52 = arith.constant 3.200000e+01 : f32
    %104 = vector.broadcast %cst_52 : f32 to vector<16x1xf32>
    %105 = arith.divf %103, %104 : vector<16x1xf32>
    %cst_53 = arith.constant 9.99999974E-6 : f32
    %106 = vector.broadcast %cst_53 : f32 to vector<16x1xf32>
    %107 = arith.addf %105, %106 : vector<16x1xf32>
    %108 = math.rsqrt %107 : vector<16x1xf32>
    %109 = vector.broadcast %108 : vector<16x1xf32> to vector<16x32xf32>
    %110 = arith.mulf %100, %109 : vector<16x32xf32>
    %111 = vector.broadcast %93 : vector<1x32xf32> to vector<16x32xf32>
    %112 = arith.mulf %110, %111 : vector<16x32xf32>
    %113 = vector.broadcast %94 : vector<1x32xf32> to vector<16x32xf32>
    %114 = arith.addf %112, %113 : vector<16x32xf32>
    %c0_54 = arith.constant 0 : index
    %c0_55 = arith.constant 0 : index
    %115 = vector.load %arg1[%c0_54, %c0_55] : memref<16x32xf32, #tpu.memory_space<vmem>>, vector<16x32xf32>
    %cst_56 = arith.constant 7.500000e-01 : f32
    %116 = vector.broadcast %cst_56 : f32 to vector<16x32xf32>
    %117 = arith.mulf %115, %116 : vector<16x32xf32>
    %cst_57 = arith.constant 2.500000e-01 : f32
    %118 = vector.broadcast %cst_57 : f32 to vector<16x32xf32>
    %119 = arith.mulf %114, %118 : vector<16x32xf32>
    %120 = arith.addf %117, %119 : vector<16x32xf32>
    %c0_58 = arith.constant 0 : index
    %c0_59 = arith.constant 0 : index
    %121 = vector.load %arg8[%c0_58, %c0_59] : memref<16x32xf32, #tpu.memory_space<vmem>>, vector<16x32xf32>
    tpu.vector_store %arg8[%c0_58, %c0_59], %120 {strides = array<i32>} : memref<16x32xf32, #tpu.memory_space<vmem>>, vector<16x32xf32>,
    return
  }
  func.func @transform_0(%arg0: i32) -> (i32, i32) {
    %c0_i32 = arith.constant 0 : i32
    %c0_i32_0 = arith.constant 0 : i32
    return %arg0, %c0_i32 : i32, i32
  }
  func.func @transform_1(%arg0: i32) -> (i32, i32, i32) {
    %c0_i32 = arith.constant 0 : i32
    %c0_i32_0 = arith.constant 0 : i32
    %c0_i32_1 = arith.constant 0 : i32
    %c0_i32_2 = arith.constant 0 : i32
    return %c0_i32, %c0_i32_0, %c0_i32_1 : i32, i32, i32
  }
  func.func @transform_2(%arg0: i32) -> (i32, i32, i32) {
    %c0_i32 = arith.constant 0 : i32
    %c0_i32_0 = arith.constant 0 : i32
    %c0_i32_1 = arith.constant 0 : i32
    %c0_i32_2 = arith.constant 0 : i32
    return %c0_i32, %c0_i32_0, %c0_i32_1 : i32, i32, i32
  }
  func.func @transform_3(%arg0: i32) -> (i32, i32, i32) {
    %c0_i32 = arith.constant 0 : i32
    %c0_i32_0 = arith.constant 0 : i32
    %c0_i32_1 = arith.constant 0 : i32
    %c0_i32_2 = arith.constant 0 : i32
    return %c0_i32, %c0_i32_0, %c0_i32_1 : i32, i32, i32
  }
  func.func @transform_4(%arg0: i32) -> (i32, i32, i32) {
    %c0_i32 = arith.constant 0 : i32
    %c0_i32_0 = arith.constant 0 : i32
    %c0_i32_1 = arith.constant 0 : i32
    %c0_i32_2 = arith.constant 0 : i32
    return %c0_i32, %c0_i32_0, %c0_i32_1 : i32, i32, i32
  }
  func.func @transform_5(%arg0: i32) -> (i32, i32) {
    %c0_i32 = arith.constant 0 : i32
    %c0_i32_0 = arith.constant 0 : i32
    %c0_i32_1 = arith.constant 0 : i32
    return %c0_i32, %c0_i32_0 : i32, i32
  }
  func.func @transform_6(%arg0: i32) -> (i32, i32) {
    %c0_i32 = arith.constant 0 : i32
    %c0_i32_0 = arith.constant 0 : i32
    %c0_i32_1 = arith.constant 0 : i32
    return %c0_i32, %c0_i32_0 : i32, i32
  }
  func.func @transform_7(%arg0: i32) -> (i32, i32) {
    %c0_i32 = arith.constant 0 : i32
    %c0_i32_0 = arith.constant 0 : i32
    return %arg0, %c0_i32 : i32, i32
  }
}

</mosaic_0001>

<llo_original>
// kernel: tpu_custom_call.1
$region0: #{tpu_custom_call.1}
  #allocation0 [shape = 'u32[]', space=smem, size = 0x4, offset = 0x4, fixed_abs, tag = 'smem constant byte address 0x4 - core index']
  #allocation1 [shape = 'u32[144,128]{1,0:T(1,128)}', space=vmem, size = 0x12000, scoped, tag = 'internal scratch']
  %s0 = inlined_call_operand.vmem [shape: f32[16,32], index: 0, kind: input, shape index: {}]
  %s1 = inlined_call_operand.vmem [shape: bf16[2,32,128], index: 1, kind: input, shape index: {}]
  %s2 = inlined_call_operand.vmem [shape: f32[2,1,128], index: 2, kind: input, shape index: {}]
  %s3 = inlined_call_operand.vmem [shape: bf16[2,128,32], index: 3, kind: input, shape index: {}]
  %s4 = inlined_call_operand.vmem [shape: f32[2,1,32], index: 4, kind: input, shape index: {}]
  %s5 = inlined_call_operand.vmem [shape: f32[1,32], index: 5, kind: input, shape index: {}]
  %s6 = inlined_call_operand.vmem [shape: f32[1,32], index: 6, kind: input, shape index: {}]
  %s7 = inlined_call_operand.hbm [shape: f32[16,32], index: 7, kind: output, shape index: {}]
  %s8 = sld [smem:[#allocation0]]
  $region38: #{tpu_custom_call.1} parent=0
    _
  %s10 = ssub.s32 1, %s8
  %s11 = scalar_select 0, %s10, %s8
  $region1: #{tpu_custom_call.1} parent=0
    #allocation2 [shape = 'u8[8192]{0}', space=vmem, size = 0x2000, scoped, tag = 'output window, operand 0, single buffered']
    #allocation3 [shape = 's32[1]{0}', space=sflag, size = 0x4, scoped, tag = 'scoped memory for tpu_custom_call.1']
    %12 = vsyncpa [#allocation3], 0
    // Predicated region
    $region2: #{tpu_custom_call.1} parent=1 // pred_check
      _
    $region3: #{tpu_custom_call.1} parent=1 // pred_check_branch
      %14 = sbr.rel (0) target = $region5
    $region4: #{tpu_custom_call.1} parent=1 // pred_region
      _
    $region5: #{tpu_custom_call.1} parent=1 // pred_fallthru
      _
    // Predicated region
    $region6: #{tpu_custom_call.1} parent=1 // pred_check
      _
    $region7: #{tpu_custom_call.1} parent=1 // pred_check_branch
      %16 = sbr.rel (0) target = $region9
    $region8: #{tpu_custom_call.1} parent=1 // pred_region
      _
    $region9: #{tpu_custom_call.1} parent=1 // pred_fallthru
      _
    // Predicated region
    $region10: #{tpu_custom_call.1} parent=1 // pred_check
      _
    $region11: #{tpu_custom_call.1} parent=1 // pred_check_branch
      %18 = sbr.rel (0) target = $region13
    $region12: #{tpu_custom_call.1} parent=1 // pred_region
      _
    $region13: #{tpu_custom_call.1} parent=1 // pred_fallthru
      _
    // Predicated region
    $region14: #{tpu_custom_call.1} parent=1 // pred_check
      _
    $region15: #{tpu_custom_call.1} parent=1 // pred_check_branch
      %20 = sbr.rel (0) target = $region17
    $region16: #{tpu_custom_call.1} parent=1 // pred_region
      _
    $region17: #{tpu_custom_call.1} parent=1 // pred_fallthru
      _
    // Predicated region
    $region18: #{tpu_custom_call.1} parent=1 // pred_check
      _
    $region19: #{tpu_custom_call.1} parent=1 // pred_check_branch
      %22 = sbr.rel (0) target = $region21
    $region20: #{tpu_custom_call.1} parent=1 // pred_region
      _
    $region21: #{tpu_custom_call.1} parent=1 // pred_fallthru
      _
    // Predicated region
    $region22: #{tpu_custom_call.1} parent=1 // pred_check
      _
    $region23: #{tpu_custom_call.1} parent=1 // pred_check_branch
      %24 = sbr.rel (0) target = $region25
    $region24: #{tpu_custom_call.1} parent=1 // pred_region
      _
    $region25: #{tpu_custom_call.1} parent=1 // pred_fallthru
      _
    // Predicated region
    $region26: #{tpu_custom_call.1} parent=1 // pred_check
      _
    $region27: #{tpu_custom_call.1} parent=1 // pred_check_branch
      %26 = sbr.rel (0) target = $region29
    $region28: #{tpu_custom_call.1} parent=1 // pred_region
      _
    $region29: #{tpu_custom_call.1} parent=1 // pred_fallthru
      _
    %v28 = vld [vmem:[%s0] sm:$0xff]
    %v29 = vld [vmem:[%s0 + $0x8] sm:$0xff]
    %v30 = vld [vmem:[%s1] sm:$0xf]
    %v31 = vld [vmem:[%s1 + $0x4] sm:$0xf]
    %v32 = vld [vmem:[%s1 + $0x8] sm:$0xf]
    %v33 = vld [vmem:[%s1 + $0xc] sm:$0xf]
    %v34 = vld [vmem:[%s2] sm:$0x1]
    %v35 = vld [vmem:[%s3] sm:$0xf]
    %v36 = vld [vmem:[%s3 + $0x4] sm:$0xf]
    %v37 = vld [vmem:[%s3 + $0x8] sm:$0xf]
    %v38 = vld [vmem:[%s3 + $0xc] sm:$0xf]
    %v39 = vld [vmem:[%s3 + $0x10] sm:$0xf]
    %v40 = vld [vmem:[%s3 + $0x14] sm:$0xf]
    %v41 = vld [vmem:[%s3 + $0x18] sm:$0xf]
    %v42 = vld [vmem:[%s3 + $0x1c] sm:$0xf]
    %v43 = vld [vmem:[%s3 + $0x20] sm:$0xf]
    %v44 = vld [vmem:[%s3 + $0x24] sm:$0xf]
    %v45 = vld [vmem:[%s3 + $0x28] sm:$0xf]
    %v46 = vld [vmem:[%s3 + $0x2c] sm:$0xf]
    %v47 = vld [vmem:[%s3 + $0x30] sm:$0xf]
    %v48 = vld [vmem:[%s3 + $0x34] sm:$0xf]
    %v49 = vld [vmem:[%s3 + $0x38] sm:$0xf]
    %v50 = vld [vmem:[%s3 + $0x3c] sm:$0xf]
    %v51 = vld [vmem:[%s4] sm:$0x1]
    %vm52 = vcmask 261120
    %v53 = vsel %vm52, %v28, 0.0
    %54 = vadd.xlane.f32.xlu0 %v53
    %v55 = vpop.xlane.xlu0 %54
    %v56 = vsel %vm52, %v29, 0.0
    %57 = vadd.xlane.f32.xlu0 %v56
    %v58 = vpop.xlane.xlu0 %57
    %v59 = vrcp.pop 32.0
    %v60 = vmul.f32 %v55, %v59
    %v61 = vmul.f32 %v58, %v59
    %v62 = vsub.f32 %v28, %v60
    %v63 = vsub.f32 %v29, %v61
    %v64 = vmul.f32 %v62, %v62
    %v65 = vmul.f32 %v63, %v63
    %v66 = vsel %vm52, %v64, 0.0
    %67 = vadd.xlane.f32.xlu0 %v66
    %v68 = vpop.xlane.xlu0 %67
    %v69 = vsel %vm52, %v65, 0.0
    %70 = vadd.xlane.f32.xlu0 %v69
    %v71 = vpop.xlane.xlu0 %70
    %v72 = vmul.f32 %v68, %v59
    %v73 = vmul.f32 %v71, %v59
    %v74 = vadd.f32 %v72, 1e-05
    %v75 = vadd.f32 %v73, 1e-05
    %v76 = vrsqrt.pop %v74
    %v77 = vrsqrt.pop %v75
    %v78 = vmul.f32 %v62, %v76
    %v79 = vmul.f32 %v63, %v77
    %v80 = vpack.c.bf16 %v79, %v78
    %v82 = vlaneseq
    %v83 = vshrl.u32 %v82, 7
    %v84 = vsub.s32 0, %v83
    %v85 = vrot.slane %v34, %v84
    %v91 = vunpack.c.l.b16 %v30
    %v92 = vunpack.c.l.b16 %v31
    %v93 = vunpack.c.l.b16 %v32
    %v94 = vunpack.c.l.b16 %v33
    %v95 = vpack.c.b16 %v92, %v91
    %v96 = vpack.c.b16 %v94, %v93
    %v100 = vsel %vm52, %v80, 0
    %102 = vmatprep.subr.bf16.mxu0 0
    %103 = vmatpush1.bf16.msra.mxu0 %v95
    %104 = vmatprep.subr.bf16.mxu0 0
    %105 = vmatpush1.bf16.msra.mxu0 %v96
    %106 = vmatprep.subr.bf16.mxu0 0
    %107 = vmatpush1.bf16.msra.mxu0 0
    %108 = vmatprep.subr.bf16.mxu0 0
    %109 = vmatpush1.bf16.msra.mxu0 0
    %110 = vmatprep.subr.bf16.mxu0 0
    %111 = vmatpush1.bf16.msra.mxu0 0
    %112 = vmatprep.subr.bf16.mxu0 0
    %113 = vmatpush1.bf16.msra.mxu0 0
    %114 = vmatprep.subr.bf16.mxu0 0
    %115 = vmatpush1.bf16.msra.mxu0 0
    %116 = vmatprep.subr.bf16.mxu0 0
    %117 = vmatpush1.bf16.msra.mxu0 0
    %118 = vmatprep.subr.bf16.mxu0 0
    %119 = vmatpush1.bf16.msra.mxu0 0
    %120 = vmatprep.subr.bf16.mxu0 0
    %121 = vmatpush1.bf16.msra.mxu0 0
    %122 = vmatprep.subr.bf16.mxu0 0
    %123 = vmatpush1.bf16.msra.mxu0 0
    %124 = vmatprep.subr.bf16.mxu0 0
    %125 = vmatpush1.bf16.msra.mxu0 0
    %126 = vmatprep.subr.bf16.mxu0 0
    %127 = vmatpush1.bf16.msra.mxu0 0
    %128 = vmatprep.subr.bf16.mxu0 0
    %129 = vmatpush1.bf16.msra.mxu0 0
    %130 = vmatprep.subr.bf16.mxu0 0
    %131 = vmatpush1.bf16.msra.mxu0 0
    %132 = vmatprep.subr.bf16.mxu0 0
    %133 = vmatpush1.bf16.msra.mxu0 0
    %134 = vmatprep.mubr.bf16.mxu0 0
    %135 = vmatmul.mubr.bf16.gmra.mrb[0].mxu0 %v100
    %v136 = vpop.f32.mrb[0].mxu0
    %v137 = vadd.f32 %v85, %v136
    %v138 = vpop.f32.mrb[0].mxu0
    %v139 = vpop.f32.mrb[0].mxu0
    %v140 = vadd.f32 %v85, %v139
    %v141 = vpop.f32.mrb[0].mxu0
    %142 = vdwg.mxu0
    %v143 = vmul.f32 %v137, %v137
    %v144 = vmul.f32 %v140, %v140
    %v145 = vmul.f32 %v137, %v143
    %v146 = vmul.f32 %v140, %v144
    %v147 = vmul.f32 %v145, 0.044715
    %v148 = vmul.f32 %v146, 0.044715
    %v149 = vadd.f32 %v137, %v147
    %v150 = vadd.f32 %v140, %v148
    %v151 = vmul.f32 %v149, 0.7978846
    %v152 = vmul.f32 %v150, 0.7978846
    %v153 = vtanh.pop %v151
    %v154 = vtanh.pop %v152
    %v155 = vadd.f32 %v153, 1.0
    %v156 = vadd.f32 %v154, 1.0
    %v157 = vmul.f32 %v155, 0.5
    %v158 = vmul.f32 %v156, 0.5
    %v159 = vmul.f32 %v137, %v157
    %v160 = vmul.f32 %v140, %v158
    %v161 = vpack.c.bf16 %v160, %v159
    %v163 = vlaneseq
    %v164 = vshrl.u32 %v163, 7
    %v165 = vsub.s32 0, %v164
    %v166 = vrot.slane %v51, %v165
    %v184 = vunpack.c.l.b16 %v35
    %v185 = vunpack.c.l.b16 %v36
    %v186 = vunpack.c.l.b16 %v37
    %v187 = vunpack.c.l.b16 %v38
    %v188 = vunpack.c.l.b16 %v39
    %v189 = vunpack.c.l.b16 %v40
    %v190 = vunpack.c.l.b16 %v41
    %v191 = vunpack.c.l.b16 %v42
    %v192 = vunpack.c.l.b16 %v43
    %v193 = vunpack.c.l.b16 %v44
    %v194 = vunpack.c.l.b16 %v45
    %v195 = vunpack.c.l.b16 %v46
    %v196 = vunpack.c.l.b16 %v47
    %v197 = vunpack.c.l.b16 %v48
    %v198 = vunpack.c.l.b16 %v49
    %v199 = vunpack.c.l.b16 %v50
    %v200 = vpack.c.b16 %v185, %v184
    %v201 = vpack.c.b16 %v187, %v186
    %v202 = vpack.c.b16 %v189, %v188
    %v203 = vpack.c.b16 %v191, %v190
    %v204 = vpack.c.b16 %v193, %v192
    %v205 = vpack.c.b16 %v195, %v194
    %v206 = vpack.c.b16 %v197, %v196
    %v207 = vpack.c.b16 %v199, %v198
    %216 = vmatprep.subr.bf16.mxu0 0
    %217 = vmatpush1.bf16.msra.mxu0 %v200
    %218 = vmatprep.subr.bf16.mxu0 0
    %219 = vmatpush1.bf16.msra.mxu0 %v201
    %220 = vmatprep.subr.bf16.mxu0 0
    %221 = vmatpush1.bf16.msra.mxu0 %v202
    %222 = vmatprep.subr.bf16.mxu0 0
    %223 = vmatpush1.bf16.msra.mxu0 %v203
    %224 = vmatprep.subr.bf16.mxu0 0
    %225 = vmatpush1.bf16.msra.mxu0 %v204
    %226 = vmatprep.subr.bf16.mxu0 0
    %227 = vmatpush1.bf16.msra.mxu0 %v205
    %228 = vmatprep.subr.bf16.mxu0 0
    %229 = vmatpush1.bf16.msra.mxu0 %v206
    %230 = vmatprep.subr.bf16.mxu0 0
    %231 = vmatpush1.bf16.msra.mxu0 %v207
    %232 = vmatprep.subr.bf16.mxu0 0
    %233 = vmatpush1.bf16.msra.mxu0 0
    %234 = vmatprep.subr.bf16.mxu0 0
    %235 = vmatpush1.bf16.msra.mxu0 0
    %236 = vmatprep.subr.bf16.mxu0 0
    %237 = vmatpush1.bf16.msra.mxu0 0
    %238 = vmatprep.subr.bf16.mxu0 0
    %239 = vmatpush1.bf16.msra.mxu0 0
    %240 = vmatprep.subr.bf16.mxu0 0
    %241 = vmatpush1.bf16.msra.mxu0 0
    %242 = vmatprep.subr.bf16.mxu0 0
    %243 = vmatpush1.bf16.msra.mxu0 0
    %244 = vmatprep.subr.bf16.mxu0 0
    %245 = vmatpush1.bf16.msra.mxu0 0
    %246 = vmatprep.subr.bf16.mxu0 0
    %247 = vmatpush1.bf16.msra.mxu0 0
    %248 = vmatprep.mubr.bf16.mxu0 0
    %249 = vmatmul.mubr.bf16.gmra.mrb[0].mxu0 %v161
    %v250 = vpop.f32.mrb[0].mxu0
    %v251 = vadd.f32 %v166, %v250
    %v252 = vpop.f32.mrb[0].mxu0
    %v253 = vpop.f32.mrb[0].mxu0
    %v254 = vadd.f32 %v166, %v253
    %v255 = vpop.f32.mrb[0].mxu0
    %256 = vdwg.mxu0
    %v257 = vadd.f32 %v28, %v251
    %v258 = vadd.f32 %v29, %v254
    %s259 = scalar_lea.vmem %s1, 16
    %v260 = vld [vmem:[%s259] sm:$0xf]
    %v261 = vld [vmem:[%s259 + $0x4] sm:$0xf]
    %v262 = vld [vmem:[%s259 + $0x8] sm:$0xf]
    %v263 = vld [vmem:[%s259 + $0xc] sm:$0xf]
    %s264 = scalar_lea.vmem %s2, 1
    %v265 = vld [vmem:[%s264] sm:$0x1]
    %s266 = scalar_lea.vmem %s3, 64
    %v267 = vld [vmem:[%s266] sm:$0xf]
    %v268 = vld [vmem:[%s266 + $0x4] sm:$0xf]
    %v269 = vld [vmem:[%s266 + $0x8] sm:$0xf]
    %v270 = vld [vmem:[%s266 + $0xc] sm:$0xf]
    %v271 = vld [vmem:[%s266 + $0x10] sm:$0xf]
    %v272 = vld [vmem:[%s266 + $0x14] sm:$0xf]
    %v273 = vld [vmem:[%s266 + $0x18] sm:$0xf]
    %v274 = vld [vmem:[%s266 + $0x1c] sm:$0xf]
    %v275 = vld [vmem:[%s266 + $0x20] sm:$0xf]
    %v276 = vld [vmem:[%s266 + $0x24] sm:$0xf]
    %v277 = vld [vmem:[%s266 + $0x28] sm:$0xf]
    %v278 = vld [vmem:[%s266 + $0x2c] sm:$0xf]
    %v279 = vld [vmem:[%s266 + $0x30] sm:$0xf]
    %v280 = vld [vmem:[%s266 + $0x34] sm:$0xf]
    %v281 = vld [vmem:[%s266 + $0x38] sm:$0xf]
    %v282 = vld [vmem:[%s266 + $0x3c] sm:$0xf]
    %s283 = scalar_lea.vmem %s4, 1
    %v284 = vld [vmem:[%s283] sm:$0x1]
    %v285 = vsel %vm52, %v257, 0.0
    %286 = vadd.xlane.f32.xlu0 %v285
    %v287 = vpop.xlane.xlu0 %286
    %v288 = vsel %vm52, %v258, 0.0
    %289 = vadd.xlane.f32.xlu0 %v288
    %v290 = vpop.xlane.xlu0 %289
    %v291 = vmul.f32 %v287, %v59
    %v292 = vmul.f32 %v290, %v59
    %v293 = vsub.f32 %v257, %v291
    %v294 = vsub.f32 %v258, %v292
    %v295 = vmul.f32 %v293, %v293
    %v296 = vmul.f32 %v294, %v294
    %v297 = vsel %vm52, %v295, 0.0
    %298 = vadd.xlane.f32.xlu0 %v297
    %v299 = vpop.xlane.xlu0 %298
    %v300 = vsel %vm52, %v296, 0.0
    %301 = vadd.xlane.f32.xlu0 %v300
    %v302 = vpop.xlane.xlu0 %301
    %v303 = vmul.f32 %v299, %v59
    %v304 = vmul.f32 %v302, %v59
    %v305 = vadd.f32 %v303, 1e-05
    %v306 = vadd.f32 %v304, 1e-05
    %v307 = vrsqrt.pop %v305
    %v308 = vrsqrt.pop %v306
    %v309 = vmul.f32 %v293, %v307
    %v310 = vmul.f32 %v294, %v308
    %v311 = vpack.c.bf16 %v310, %v309
    %v313 = vlaneseq
    %v314 = vshrl.u32 %v313, 7
    %v315 = vsub.s32 0, %v314
    %v316 = vrot.slane %v265, %v315
    %v322 = vunpack.c.l.b16 %v260
    %v323 = vunpack.c.l.b16 %v261
    %v324 = vunpack.c.l.b16 %v262
    %v325 = vunpack.c.l.b16 %v263
    %v326 = vpack.c.b16 %v323, %v322
    %v327 = vpack.c.b16 %v325, %v324
    %v331 = vsel %vm52, %v311, 0
    %333 = vmatprep.subr.bf16.mxu0 0
    %334 = vmatpush1.bf16.msra.mxu0 %v326
    %335 = vmatprep.subr.bf16.mxu0 0
    %336 = vmatpush1.bf16.msra.mxu0 %v327
    %337 = vmatprep.subr.bf16.mxu0 0
    %338 = vmatpush1.bf16.msra.mxu0 0
    %339 = vmatprep.subr.bf16.mxu0 0
    %340 = vmatpush1.bf16.msra.mxu0 0
    %341 = vmatprep.subr.bf16.mxu0 0
    %342 = vmatpush1.bf16.msra.mxu0 0
    %343 = vmatprep.subr.bf16.mxu0 0
    %344 = vmatpush1.bf16.msra.mxu0 0
    %345 = vmatprep.subr.bf16.mxu0 0
    %346 = vmatpush1.bf16.msra.mxu0 0
    %347 = vmatprep.subr.bf16.mxu0 0
    %348 = vmatpush1.bf16.msra.mxu0 0
    %349 = vmatprep.subr.bf16.mxu0 0
    %350 = vmatpush1.bf16.msra.mxu0 0
    %351 = vmatprep.subr.bf16.mxu0 0
    %352 = vmatpush1.bf16.msra.mxu0 0
    %353 = vmatprep.subr.bf16.mxu0 0
    %354 = vmatpush1.bf16.msra.mxu0 0
    %355 = vmatprep.subr.bf16.mxu0 0
    %356 = vmatpush1.bf16.msra.mxu0 0
    %357 = vmatprep.subr.bf16.mxu0 0
    %358 = vmatpush1.bf16.msra.mxu0 0
    %359 = vmatprep.subr.bf16.mxu0 0
    %360 = vmatpush1.bf16.msra.mxu0 0
    %361 = vmatprep.subr.bf16.mxu0 0
    %362 = vmatpush1.bf16.msra.mxu0 0
    %363 = vmatprep.subr.bf16.mxu0 0
    %364 = vmatpush1.bf16.msra.mxu0 0
    %365 = vmatprep.mubr.bf16.mxu0 0
    %366 = vmatmul.mubr.bf16.gmra.mrb[0].mxu0 %v331
    %v367 = vpop.f32.mrb[0].mxu0
    %v368 = vadd.f32 %v316, %v367
    %v369 = vpop.f32.mrb[0].mxu0
    %v370 = vpop.f32.mrb[0].mxu0
    %v371 = vadd.f32 %v316, %v370
    %v372 = vpop.f32.mrb[0].mxu0
    %373 = vdwg.mxu0
    %v374 = vmul.f32 %v368, %v368
    %v375 = vmul.f32 %v371, %v371
    %v376 = vmul.f32 %v368, %v374
    %v377 = vmul.f32 %v371, %v375
    %v378 = vmul.f32 %v376, 0.044715
    %v379 = vmul.f32 %v377, 0.044715
    %v380 = vadd.f32 %v368, %v378
    %v381 = vadd.f32 %v371, %v379
    %v382 = vmul.f32 %v380, 0.7978846
    %v383 = vmul.f32 %v381, 0.7978846
    %v384 = vtanh.pop %v382
    %v385 = vtanh.pop %v383
    %v386 = vadd.f32 %v384, 1.0
    %v387 = vadd.f32 %v385, 1.0
    %v388 = vmul.f32 %v386, 0.5
    %v389 = vmul.f32 %v387, 0.5
    %v390 = vmul.f32 %v368, %v388
    %v391 = vmul.f32 %v371, %v389
    %v392 = vpack.c.bf16 %v391, %v390
    %v394 = vlaneseq
    %v395 = vshrl.u32 %v394, 7
    %v396 = vsub.s32 0, %v395
    %v397 = vrot.slane %v284, %v396
    %v415 = vunpack.c.l.b16 %v267
    %v416 = vunpack.c.l.b16 %v268
    %v417 = vunpack.c.l.b16 %v269
    %v418 = vunpack.c.l.b16 %v270
    %v419 = vunpack.c.l.b16 %v271
    %v420 = vunpack.c.l.b16 %v272
    %v421 = vunpack.c.l.b16 %v273
    %v422 = vunpack.c.l.b16 %v274
    %v423 = vunpack.c.l.b16 %v275
    %v424 = vunpack.c.l.b16 %v276
    %v425 = vunpack.c.l.b16 %v277
    %v426 = vunpack.c.l.b16 %v278
    %v427 = vunpack.c.l.b16 %v279
    %v428 = vunpack.c.l.b16 %v280
    %v429 = vunpack.c.l.b16 %v281
    %v430 = vunpack.c.l.b16 %v282
    %v431 = vpack.c.b16 %v416, %v415
    %v432 = vpack.c.b16 %v418, %v417
    %v433 = vpack.c.b16 %v420, %v419
    %v434 = vpack.c.b16 %v422, %v421
    %v435 = vpack.c.b16 %v424, %v423
    %v436 = vpack.c.b16 %v426, %v425
    %v437 = vpack.c.b16 %v428, %v427
    %v438 = vpack.c.b16 %v430, %v429
    %447 = vmatprep.subr.bf16.mxu0 0
    %448 = vmatpush1.bf16.msra.mxu0 %v431
    %449 = vmatprep.subr.bf16.mxu0 0
    %450 = vmatpush1.bf16.msra.mxu0 %v432
    %451 = vmatprep.subr.bf16.mxu0 0
    %452 = vmatpush1.bf16.msra.mxu0 %v433
    %453 = vmatprep.subr.bf16.mxu0 0
    %454 = vmatpush1.bf16.msra.mxu0 %v434
    %455 = vmatprep.subr.bf16.mxu0 0
    %456 = vmatpush1.bf16.msra.mxu0 %v435
    %457 = vmatprep.subr.bf16.mxu0 0
    %458 = vmatpush1.bf16.msra.mxu0 %v436
    %459 = vmatprep.subr.bf16.mxu0 0
    %460 = vmatpush1.bf16.msra.mxu0 %v437
    %461 = vmatprep.subr.bf16.mxu0 0
    %462 = vmatpush1.bf16.msra.mxu0 %v438
    %463 = vmatprep.subr.bf16.mxu0 0
    %464 = vmatpush1.bf16.msra.mxu0 0
    %465 = vmatprep.subr.bf16.mxu0 0
    %466 = vmatpush1.bf16.msra.mxu0 0
    %467 = vmatprep.subr.bf16.mxu0 0
    %468 = vmatpush1.bf16.msra.mxu0 0
    %469 = vmatprep.subr.bf16.mxu0 0
    %470 = vmatpush1.bf16.msra.mxu0 0
    %471 = vmatprep.subr.bf16.mxu0 0
    %472 = vmatpush1.bf16.msra.mxu0 0
    %473 = vmatprep.subr.bf16.mxu0 0
    %474 = vmatpush1.bf16.msra.mxu0 0
    %475 = vmatprep.subr.bf16.mxu0 0
    %476 = vmatpush1.bf16.msra.mxu0 0
    %477 = vmatprep.subr.bf16.mxu0 0
    %478 = vmatpush1.bf16.msra.mxu0 0
    %479 = vmatprep.mubr.bf16.mxu0 0
    %480 = vmatmul.mubr.bf16.gmra.mrb[0].mxu0 %v392
    %v481 = vpop.f32.mrb[0].mxu0
    %v482 = vadd.f32 %v397, %v481
    %v483 = vpop.f32.mrb[0].mxu0
    %v484 = vpop.f32.mrb[0].mxu0
    %v485 = vadd.f32 %v397, %v484
    %v486 = vpop.f32.mrb[0].mxu0
    %487 = vdwg.mxu0
    %v488 = vadd.f32 %v257, %v482
    %v489 = vadd.f32 %v258, %v485
    %v490 = vld [vmem:[%s5] sm:$0x1]
    %v491 = vld [vmem:[%s6] sm:$0x1]
    %v492 = vsel %vm52, %v488, 0.0
    %493 = vadd.xlane.f32.xlu0 %v492
    %v494 = vpop.xlane.xlu0 %493
    %v495 = vsel %vm52, %v489, 0.0
    %496 = vadd.xlane.f32.xlu0 %v495
    %v497 = vpop.xlane.xlu0 %496
    %v498 = vmul.f32 %v494, %v59
    %v499 = vmul.f32 %v497, %v59
    %v500 = vsub.f32 %v488, %v498
    %v501 = vsub.f32 %v489, %v499
    %v502 = vmul.f32 %v500, %v500
    %v503 = vmul.f32 %v501, %v501
    %v504 = vsel %vm52, %v502, 0.0
    %505 = vadd.xlane.f32.xlu0 %v504
    %v506 = vpop.xlane.xlu0 %505
    %v507 = vsel %vm52, %v503, 0.0
    %508 = vadd.xlane.f32.xlu0 %v507
    %v509 = vpop.xlane.xlu0 %508
    %v510 = vmul.f32 %v506, %v59
    %v511 = vmul.f32 %v509, %v59
    %v512 = vadd.f32 %v510, 1e-05
    %v513 = vadd.f32 %v511, 1e-05
    %v514 = vrsqrt.pop %v512
    %v515 = vrsqrt.pop %v513
    %v516 = vmul.f32 %v500, %v514
    %v517 = vmul.f32 %v501, %v515
    %v519 = vlaneseq
    %v520 = vshrl.u32 %v519, 7
    %v521 = vsub.s32 0, %v520
    %v522 = vrot.slane %v490, %v521
    %v524 = vmul.f32 %v516, %v522
    %v525 = vmul.f32 %v517, %v522
    %v527 = vlaneseq
    %v528 = vshrl.u32 %v527, 7
    %v529 = vsub.s32 0, %v528
    %v530 = vrot.slane %v491, %v529
    %v532 = vadd.f32 %v524, %v530
    %v533 = vadd.f32 %v525, %v530
    %v534 = vmul.f32 %v28, 0.75
    %v535 = vmul.f32 %v29, 0.75
    %v536 = vmul.f32 %v532, 0.25
    %v537 = vmul.f32 %v533, 0.25
    %v538 = vadd.f32 %v534, %v536
    %v539 = vadd.f32 %v535, %v537
    %540 = vst.msk [vmem:[#allocation2] sm:$0xff] %vm52, %v538
    %541 = vst.msk [vmem:[#allocation2 + $0x8] sm:$0xff] %vm52, %v539
    // Predicated region
    $region30: #{tpu_custom_call.1} parent=1 // pred_check
      _
    $region31: #{tpu_custom_call.1} parent=1 // pred_check_branch
      %543 = sbr.rel (0) target = $region33
    $region32: #{tpu_custom_call.1} parent=1 // pred_region
      %s545 = ssub.s32 256, 256
      %546 = vsyncadd [#allocation3], %s545
      %s547 = sshll.u32 [#allocation2], 4
      %s548 = int_to_ptr.vmem [resolvable:$true] %s547
      %553 = dma.vmem_to_hbm [thread:$0]  %s548, 256, %s7, [#allocation3], 128, 128, 8
    $region33: #{tpu_custom_call.1} parent=1 // pred_fallthru
      _
    // Predicated region
    $region34: #{tpu_custom_call.1} parent=1 // pred_check
      _
    $region35: #{tpu_custom_call.1} parent=1 // pred_check_branch
      %555 = sbr.rel (0) target = $region37
    $region36: #{tpu_custom_call.1} parent=1 // pred_region
      %556 = dma.done [#allocation3], 256
    $region37: #{tpu_custom_call.1} parent=1 // pred_fallthru
      _
    %557 = vsyncpa [#allocation3], 1

// kernel: tpu_custom_call.1
$region0: #{tpu_custom_call.1}
  #allocation0 [shape = 'u32[]', space=smem, size = 0x4, offset = 0x4, fixed_abs, tag = 'smem constant byte address 0x4 - core index']
  #allocation1 [shape = 'u32[144,128]{1,0:T(1,128)}', space=vmem, size = 0x12000, scoped, tag = 'internal scratch']
  %s0 = inlined_call_operand.vmem [shape: f32[16,32], index: 0, kind: input, shape index: {}]
  %s1 = inlined_call_operand.vmem [shape: bf16[2,32,128], index: 1, kind: input, shape index: {}]
  %s2 = inlined_call_operand.vmem [shape: f32[2,1,128], index: 2, kind: input, shape index: {}]
  %s3 = inlined_call_operand.vmem [shape: bf16[2,128,32], index: 3, kind: input, shape index: {}]
  %s4 = inlined_call_operand.vmem [shape: f32[2,1,32], index: 4, kind: input, shape index: {}]
  %s5 = inlined_call_operand.vmem [shape: f32[1,32], index: 5, kind: input, shape index: {}]
  %s6 = inlined_call_operand.vmem [shape: f32[1,32], index: 6, kind: input, shape index: {}]
  %s7 = inlined_call_operand.hbm [shape: f32[16,32], index: 7, kind: output, shape index: {}]
  %s8 = sld [smem:[#allocation0]]
  $region38: #{tpu_custom_call.1} parent=0
    _
  %s10 = ssub.s32 1, %s8
  %s11 = scalar_select 0, %s10, %s8
  $region1: #{tpu_custom_call.1} parent=0
    #allocation2 [shape = 'u8[8192]{0}', space=vmem, size = 0x2000, scoped, tag = 'output window, operand 0, single buffered']
    #allocation3 [shape = 's32[1]{0}', space=sflag, size = 0x4, scoped, tag = 'scoped memory for tpu_custom_call.1']
    %12 = vsyncpa [#allocation3], 0
    // Predicated region
    $region2: #{tpu_custom_call.1} parent=1 // pred_check
      _
    $region3: #{tpu_custom_call.1} parent=1 // pred_check_branch
      %14 = sbr.rel (0) target = $region5
    $region4: #{tpu_custom_call.1} parent=1 // pred_region
      _
    $region5: #{tpu_custom_call.1} parent=1 // pred_fallthru
      _
    // Predicated region
    $region6: #{tpu_custom_call.1} parent=1 // pred_check
      _
    $region7: #{tpu_custom_call.1} parent=1 // pred_check_branch
      %16 = sbr.rel (0) target = $region9
    $region8: #{tpu_custom_call.1} parent=1 // pred_region
      _
    $region9: #{tpu_custom_call.1} parent=1 // pred_fallthru
      _
    // Predicated region
    $region10: #{tpu_custom_call.1} parent=1 // pred_check
      _
    $region11: #{tpu_custom_call.1} parent=1 // pred_check_branch
      %18 = sbr.rel (0) target = $region13
    $region12: #{tpu_custom_call.1} parent=1 // pred_region
      _
    $region13: #{tpu_custom_call.1} parent=1 // pred_fallthru
      _
    // Predicated region
    $region14: #{tpu_custom_call.1} parent=1 // pred_check
      _
    $region15: #{tpu_custom_call.1} parent=1 // pred_check_branch
      %20 = sbr.rel (0) target = $region17
    $region16: #{tpu_custom_call.1} parent=1 // pred_region
      _
    $region17: #{tpu_custom_call.1} parent=1 // pred_fallthru
      _
    // Predicated region
    $region18: #{tpu_custom_call.1} parent=1 // pred_check
      _
    $region19: #{tpu_custom_call.1} parent=1 // pred_check_branch
      %22 = sbr.rel (0) target = $region21
    $region20: #{tpu_custom_call.1} parent=1 // pred_region
      _
    $region21: #{tpu_custom_call.1} parent=1 // pred_fallthru
      _
    // Predicated region
    $region22: #{tpu_custom_call.1} parent=1 // pred_check
      _
    $region23: #{tpu_custom_call.1} parent=1 // pred_check_branch
      %24 = sbr.rel (0) target = $region25
    $region24: #{tpu_custom_call.1} parent=1 // pred_region
      _
    $region25: #{tpu_custom_call.1} parent=1 // pred_fallthru
      _
    // Predicated region
    $region26: #{tpu_custom_call.1} parent=1 // pred_check
      _
    $region27: #{tpu_custom_call.1} parent=1 // pred_check_branch
      %26 = sbr.rel (0) target = $region29
    $region28: #{tpu_custom_call.1} parent=1 // pred_region
      _
    $region29: #{tpu_custom_call.1} parent=1 // pred_fallthru
      _
    %v28 = vld [vmem:[%s0] sm:$0xff]
    %v29 = vld [vmem:[%s0 + $0x8] sm:$0xff]
    %v30 = vld [vmem:[%s1] sm:$0xf]
    %v31 = vld [vmem:[%s1 + $0x4] sm:$0xf]
    %v32 = vld [vmem:[%s1 + $0x8] sm:$0xf]
    %v33 = vld [vmem:[%s1 + $0xc] sm:$0xf]
    %v34 = vld [vmem:[%s2] sm:$0x1]
    %v35 = vld [vmem:[%s3] sm:$0xf]
    %v36 = vld [vmem:[%s3 + $0x4] sm:$0xf]
    %v37 = vld [vmem:[%s3 + $0x8] sm:$0xf]
    %v38 = vld [vmem:[%s3 + $0xc] sm:$0xf]
    %v39 = vld [vmem:[%s3 + $0x10] sm:$0xf]
    %v40 = vld [vmem:[%s3 + $0x14] sm:$0xf]
    %v41 = vld [vmem:[%s3 + $0x18] sm:$0xf]
    %v42 = vld [vmem:[%s3 + $0x1c] sm:$0xf]
    %v43 = vld [vmem:[%s3 + $0x20] sm:$0xf]
    %v44 = vld [vmem:[%s3 + $0x24] sm:$0xf]
    %v45 = vld [vmem:[%s3 + $0x28] sm:$0xf]
    %v46 = vld [vmem:[%s3 + $0x2c] sm:$0xf]
    %v47 = vld [vmem:[%s3 + $0x30] sm:$0xf]
    %v48 = vld [vmem:[%s3 + $0x34] sm:$0xf]
    %v49 = vld [vmem:[%s3 + $0x38] sm:$0xf]
    %v50 = vld [vmem:[%s3 + $0x3c] sm:$0xf]
    %v51 = vld [vmem:[%s4] sm:$0x1]
    %vm52 = vcmask 261120
    %v53 = vsel %vm52, %v28, 0.0
    %54 = vadd.xlane.f32.xlu0 %v53
    %v55 = vpop.xlane.xlu0 %54
    %v56 = vsel %vm52, %v29, 0.0
    %57 = vadd.xlane.f32.xlu0 %v56
    %v58 = vpop.xlane.xlu0 %57
    %v59 = vrcp.pop 32.0
    %v60 = vmul.f32 %v55, %v59
    %v61 = vmul.f32 %v58, %v59
    %v62 = vsub.f32 %v28, %v60
    %v63 = vsub.f32 %v29, %v61
    %v64 = vmul.f32 %v62, %v62
    %v65 = vmul.f32 %v63, %v63
    %v66 = vsel %vm52, %v64, 0.0
    %67 = vadd.xlane.f32.xlu0 %v66
    %v68 = vpop.xlane.xlu0 %67
    %v69 = vsel %vm52, %v65, 0.0
    %70 = vadd.xlane.f32.xlu0 %v69
    %v71 = vpop.xlane.xlu0 %70
    %v72 = vmul.f32 %v68, %v59
    %v73 = vmul.f32 %v71, %v59
    %v74 = vadd.f32 %v72, 1e-05
    %v75 = vadd.f32 %v73, 1e-05
    %v76 = vrsqrt.pop %v74
    %v77 = vrsqrt.pop %v75
    %v78 = vmul.f32 %v62, %v76
    %v79 = vmul.f32 %v63, %v77
    %v80 = vpack.c.bf16 %v79, %v78
    %v82 = vlaneseq
    %v83 = vshrl.u32 %v82, 7
    %v84 = vsub.s32 0, %v83
    %v85 = vrot.slane %v34, %v84
    %v91 = vunpack.c.l.b16 %v30
    %v92 = vunpack.c.l.b16 %v31
    %v93 = vunpack.c.l.b16 %v32
    %v94 = vunpack.c.l.b16 %v33
    %v95 = vpack.c.b16 %v92, %v91
    %v96 = vpack.c.b16 %v94, %v93
    %v100 = vsel %vm52, %v80, 0
    %102 = vmatprep.subr.bf16.mxu0 0
    %103 = vmatpush1.bf16.msra.mxu0 %v95
    %104 = vmatprep.subr.bf16.mxu0 0
    %105 = vmatpush1.bf16.msra.mxu0 %v96
    %106 = vmatprep.subr.bf16.mxu0 0
    %107 = vmatpush1.bf16.msra.mxu0 0
    %108 = vmatprep.subr.bf16.mxu0 0
    %109 = vmatpush1.bf16.msra.mxu0 0
    %110 = vmatprep.subr.bf16.mxu0 0
    %111 = vmatpush1.bf16.msra.mxu0 0
    %112 = vmatprep.subr.bf16.mxu0 0
    %113 = vmatpush1.bf16.msra.mxu0 0
    %114 = vmatprep.subr.bf16.mxu0 0
    %115 = vmatpush1.bf16.msra.mxu0 0
    %116 = vmatprep.subr.bf16.mxu0 0
    %117 = vmatpush1.bf16.msra.mxu0 0
    %118 = vmatprep.subr.bf16.mxu0 0
    %119 = vmatpush1.bf16.msra.mxu0 0
    %120 = vmatprep.subr.bf16.mxu0 0
    %121 = vmatpush1.bf16.msra.mxu0 0
    %122 = vmatprep.subr.bf16.mxu0 0
    %123 = vmatpush1.bf16.msra.mxu0 0
    %124 = vmatprep.subr.bf16.mxu0 0
    %125 = vmatpush1.bf16.msra.mxu0 0
    %126 = vmatprep.subr.bf16.mxu0 0
    %127 = vmatpush1.bf16.msra.mxu0 0
    %128 = vmatprep.subr.bf16.mxu0 0
    %129 = vmatpush1.bf16.msra.mxu0 0
    %130 = vmatprep.subr.bf16.mxu0 0
    %131 = vmatpush1.bf16.msra.mxu0 0
    %132 = vmatprep.subr.bf16.mxu0 0
    %133 = vmatpush1.bf16.msra.mxu0 0
    %134 = vmatprep.mubr.bf16.mxu0 0
    %135 = vmatmul.mubr.bf16.gmra.mrb[0].mxu0 %v100
    %v136 = vpop.f32.mrb[0].mxu0
    %v137 = vadd.f32 %v85, %v136
    %v138 = vpop.f32.mrb[0].mxu0
    %v139 = vpop.f32.mrb[0].mxu0
    %v140 = vadd.f32 %v85, %v139
    %v141 = vpop.f32.mrb[0].mxu0
    %142 = vdwg.mxu0
    %v143 = vmul.f32 %v137, %v137
    %v144 = vmul.f32 %v140, %v140
    %v145 = vmul.f32 %v137, %v143
    %v146 = vmul.f32 %v140, %v144
    %v147 = vmul.f32 %v145, 0.044715
    %v148 = vmul.f32 %v146, 0.044715
    %v149 = vadd.f32 %v137, %v147
    %v150 = vadd.f32 %v140, %v148
    %v151 = vmul.f32 %v149, 0.7978846
    %v152 = vmul.f32 %v150, 0.7978846
    %v153 = vtanh.pop %v151
    %v154 = vtanh.pop %v152
    %v155 = vadd.f32 %v153, 1.0
    %v156 = vadd.f32 %v154, 1.0
    %v157 = vmul.f32 %v155, 0.5
    %v158 = vmul.f32 %v156, 0.5
    %v159 = vmul.f32 %v137, %v157
    %v160 = vmul.f32 %v140, %v158
    %v161 = vpack.c.bf16 %v160, %v159
    %v163 = vlaneseq
    %v164 = vshrl.u32 %v163, 7
    %v165 = vsub.s32 0, %v164
    %v166 = vrot.slane %v51, %v165
    %v184 = vunpack.c.l.b16 %v35
    %v185 = vunpack.c.l.b16 %v36
    %v186 = vunpack.c.l.b16 %v37
    %v187 = vunpack.c.l.b16 %v38
    %v188 = vunpack.c.l.b16 %v39
    %v189 = vunpack.c.l.b16 %v40
    %v190 = vunpack.c.l.b16 %v41
    %v191 = vunpack.c.l.b16 %v42
    %v192 = vunpack.c.l.b16 %v43
    %v193 = vunpack.c.l.b16 %v44
    %v194 = vunpack.c.l.b16 %v45
    %v195 = vunpack.c.l.b16 %v46
    %v196 = vunpack.c.l.b16 %v47
    %v197 = vunpack.c.l.b16 %v48
    %v198 = vunpack.c.l.b16 %v49
    %v199 = vunpack.c.l.b16 %v50
    %v200 = vpack.c.b16 %v185, %v184
    %v201 = vpack.c.b16 %v187, %v186
    %v202 = vpack.c.b16 %v189, %v188
    %v203 = vpack.c.b16 %v191, %v190
    %v204 = vpack.c.b16 %v193, %v192
    %v205 = vpack.c.b16 %v195, %v194
    %v206 = vpack.c.b16 %v197, %v196
    %v207 = vpack.c.b16 %v199, %v198
    %216 = vmatprep.subr.bf16.mxu0 0
    %217 = vmatpush1.bf16.msra.mxu0 %v200
    %218 = vmatprep.subr.bf16.mxu0 0
    %219 = vmatpush1.bf16.msra.mxu0 %v201
    %220 = vmatprep.subr.bf16.mxu0 0
    %221 = vmatpush1.bf16.msra.mxu0 %v202
    %222 = vmatprep.subr.bf16.mxu0 0
    %223 = vmatpush1.bf16.msra.mxu0 %v203
    %224 = vmatprep.subr.bf16.mxu0 0
    %225 = vmatpush1.bf16.msra.mxu0 %v204
    %226 = vmatprep.subr.bf16.mxu0 0
    %227 = vmatpush1.bf16.msra.mxu0 %v205
    %228 = vmatprep.subr.bf16.mxu0 0
    %229 = vmatpush1.bf16.msra.mxu0 %v206
    %230 = vmatprep.subr.bf16.mxu0 0
    %231 = vmatpush1.bf16.msra.mxu0 %v207
    %232 = vmatprep.subr.bf16.mxu0 0
    %233 = vmatpush1.bf16.msra.mxu0 0
    %234 = vmatprep.subr.bf16.mxu0 0
    %235 = vmatpush1.bf16.msra.mxu0 0
    %236 = vmatprep.subr.bf16.mxu0 0
    %237 = vmatpush1.bf16.msra.mxu0 0
    %238 = vmatprep.subr.bf16.mxu0 0
    %239 = vmatpush1.bf16.msra.mxu0 0
    %240 = vmatprep.subr.bf16.mxu0 0
    %241 = vmatpush1.bf16.msra.mxu0 0
    %242 = vmatprep.subr.bf16.mxu0 0
    %243 = vmatpush1.bf16.msra.mxu0 0
    %244 = vmatprep.subr.bf16.mxu0 0
    %245 = vmatpush1.bf16.msra.mxu0 0
    %246 = vmatprep.subr.bf16.mxu0 0
    %247 = vmatpush1.bf16.msra.mxu0 0
    %248 = vmatprep.mubr.bf16.mxu0 0
    %249 = vmatmul.mubr.bf16.gmra.mrb[0].mxu0 %v161
    %v250 = vpop.f32.mrb[0].mxu0
    %v251 = vadd.f32 %v166, %v250
    %v252 = vpop.f32.mrb[0].mxu0
    %v253 = vpop.f32.mrb[0].mxu0
    %v254 = vadd.f32 %v166, %v253
    %v255 = vpop.f32.mrb[0].mxu0
    %256 = vdwg.mxu0
    %v257 = vadd.f32 %v28, %v251
    %v258 = vadd.f32 %v29, %v254
    %s259 = scalar_lea.vmem %s1, 16
    %v260 = vld [vmem:[%s259] sm:$0xf]
    %v261 = vld [vmem:[%s259 + $0x4] sm:$0xf]
    %v262 = vld [vmem:[%s259 + $0x8] sm:$0xf]
    %v263 = vld [vmem:[%s259 + $0xc] sm:$0xf]
    %s264 = scalar_lea.vmem %s2, 1
    %v265 = vld [vmem:[%s264] sm:$0x1]
    %s266 = scalar_lea.vmem %s3, 64
    %v267 = vld [vmem:[%s266] sm:$0xf]
    %v268 = vld [vmem:[%s266 + $0x4] sm:$0xf]
    %v269 = vld [vmem:[%s266 + $0x8] sm:$0xf]
    %v270 = vld [vmem:[%s266 + $0xc] sm:$0xf]
    %v271 = vld [vmem:[%s266 + $0x10] sm:$0xf]
    %v272 = vld [vmem:[%s266 + $0x14] sm:$0xf]
    %v273 = vld [vmem:[%s266 + $0x18] sm:$0xf]
    %v274 = vld [vmem:[%s266 + $0x1c] sm:$0xf]
    %v275 = vld [vmem:[%s266 + $0x20] sm:$0xf]
    %v276 = vld [vmem:[%s266 + $0x24] sm:$0xf]
    %v277 = vld [vmem:[%s266 + $0x28] sm:$0xf]
    %v278 = vld [vmem:[%s266 + $0x2c] sm:$0xf]
    %v279 = vld [vmem:[%s266 + $0x30] sm:$0xf]
    %v280 = vld [vmem:[%s266 + $0x34] sm:$0xf]
    %v281 = vld [vmem:[%s266 + $0x38] sm:$0xf]
    %v282 = vld [vmem:[%s266 + $0x3c] sm:$0xf]
    %s283 = scalar_lea.vmem %s4, 1
    %v284 = vld [vmem:[%s283] sm:$0x1]
    %v285 = vsel %vm52, %v257, 0.0
    %286 = vadd.xlane.f32.xlu0 %v285
    %v287 = vpop.xlane.xlu0 %286
    %v288 = vsel %vm52, %v258, 0.0
    %289 = vadd.xlane.f32.xlu0 %v288
    %v290 = vpop.xlane.xlu0 %289
    %v291 = vmul.f32 %v287, %v59
    %v292 = vmul.f32 %v290, %v59
    %v293 = vsub.f32 %v257, %v291
    %v294 = vsub.f32 %v258, %v292
    %v295 = vmul.f32 %v293, %v293
    %v296 = vmul.f32 %v294, %v294
    %v297 = vsel %vm52, %v295, 0.0
    %298 = vadd.xlane.f32.xlu0 %v297
    %v299 = vpop.xlane.xlu0 %298
    %v300 = vsel %vm52, %v296, 0.0
    %301 = vadd.xlane.f32.xlu0 %v300
    %v302 = vpop.xlane.xlu0 %301
    %v303 = vmul.f32 %v299, %v59
    %v304 = vmul.f32 %v302, %v59
    %v305 = vadd.f32 %v303, 1e-05
    %v306 = vadd.f32 %v304, 1e-05
    %v307 = vrsqrt.pop %v305
    %v308 = vrsqrt.pop %v306
    %v309 = vmul.f32 %v293, %v307
    %v310 = vmul.f32 %v294, %v308
    %v311 = vpack.c.bf16 %v310, %v309
    %v313 = vlaneseq
    %v314 = vshrl.u32 %v313, 7
    %v315 = vsub.s32 0, %v314
    %v316 = vrot.slane %v265, %v315
    %v322 = vunpack.c.l.b16 %v260
    %v323 = vunpack.c.l.b16 %v261
    %v324 = vunpack.c.l.b16 %v262
    %v325 = vunpack.c.l.b16 %v263
    %v326 = vpack.c.b16 %v323, %v322
    %v327 = vpack.c.b16 %v325, %v324
    %v331 = vsel %vm52, %v311, 0
    %333 = vmatprep.subr.bf16.mxu0 0
    %334 = vmatpush1.bf16.msra.mxu0 %v326
    %335 = vmatprep.subr.bf16.mxu0 0
    %336 = vmatpush1.bf16.msra.mxu0 %v327
    %337 = vmatprep.subr.bf16.mxu0 0
    %338 = vmatpush1.bf16.msra.mxu0 0
    %339 = vmatprep.subr.bf16.mxu0 0
    %340 = vmatpush1.bf16.msra.mxu0 0
    %341 = vmatprep.subr.bf16.mxu0 0
    %342 = vmatpush1.bf16.msra.mxu0 0
    %343 = vmatprep.subr.bf16.mxu0 0
    %344 = vmatpush1.bf16.msra.mxu0 0
    %345 = vmatprep.subr.bf16.mxu0 0
    %346 = vmatpush1.bf16.msra.mxu0 0
    %347 = vmatprep.subr.bf16.mxu0 0
    %348 = vmatpush1.bf16.msra.mxu0 0
    %349 = vmatprep.subr.bf16.mxu0 0
    %350 = vmatpush1.bf16.msra.mxu0 0
    %351 = vmatprep.subr.bf16.mxu0 0
    %352 = vmatpush1.bf16.msra.mxu0 0
    %353 = vmatprep.subr.bf16.mxu0 0
    %354 = vmatpush1.bf16.msra.mxu0 0
    %355 = vmatprep.subr.bf16.mxu0 0
    %356 = vmatpush1.bf16.msra.mxu0 0
    %357 = vmatprep.subr.bf16.mxu0 0
    %358 = vmatpush1.bf16.msra.mxu0 0
    %359 = vmatprep.subr.bf16.mxu0 0
    %360 = vmatpush1.bf16.msra.mxu0 0
    %361 = vmatprep.subr.bf16.mxu0 0
    %362 = vmatpush1.bf16.msra.mxu0 0
    %363 = vmatprep.subr.bf16.mxu0 0
    %364 = vmatpush1.bf16.msra.mxu0 0
    %365 = vmatprep.mubr.bf16.mxu0 0
    %366 = vmatmul.mubr.bf16.gmra.mrb[0].mxu0 %v331
    %v367 = vpop.f32.mrb[0].mxu0
    %v368 = vadd.f32 %v316, %v367
    %v369 = vpop.f32.mrb[0].mxu0
    %v370 = vpop.f32.mrb[0].mxu0
    %v371 = vadd.f32 %v316, %v370
    %v372 = vpop.f32.mrb[0].mxu0
    %373 = vdwg.mxu0
    %v374 = vmul.f32 %v368, %v368
    %v375 = vmul.f32 %v371, %v371
    %v376 = vmul.f32 %v368, %v374
    %v377 = vmul.f32 %v371, %v375
    %v378 = vmul.f32 %v376, 0.044715
    %v379 = vmul.f32 %v377, 0.044715
    %v380 = vadd.f32 %v368, %v378
    %v381 = vadd.f32 %v371, %v379
    %v382 = vmul.f32 %v380, 0.7978846
    %v383 = vmul.f32 %v381, 0.7978846
    %v384 = vtanh.pop %v382
    %v385 = vtanh.pop %v383
    %v386 = vadd.f32 %v384, 1.0
    %v387 = vadd.f32 %v385, 1.0
    %v388 = vmul.f32 %v386, 0.5
    %v389 = vmul.f32 %v387, 0.5
    %v390 = vmul.f32 %v368, %v388
    %v391 = vmul.f32 %v371, %v389
    %v392 = vpack.c.bf16 %v391, %v390
    %v394 = vlaneseq
    %v395 = vshrl.u32 %v394, 7
    %v396 = vsub.s32 0, %v395
    %v397 = vrot.slane %v284, %v396
    %v415 = vunpack.c.l.b16 %v267
    %v416 = vunpack.c.l.b16 %v268
    %v417 = vunpack.c.l.b16 %v269
    %v418 = vunpack.c.l.b16 %v270
    %v419 = vunpack.c.l.b16 %v271
    %v420 = vunpack.c.l.b16 %v272
    %v421 = vunpack.c.l.b16 %v273
    %v422 = vunpack.c.l.b16 %v274
    %v423 = vunpack.c.l.b16 %v275
    %v424 = vunpack.c.l.b16 %v276
    %v425 = vunpack.c.l.b16 %v277
    %v426 = vunpack.c.l.b16 %v278
    %v427 = vunpack.c.l.b16 %v279
    %v428 = vunpack.c.l.b16 %v280
    %v429 = vunpack.c.l.b16 %v281
    %v430 = vunpack.c.l.b16 %v282
    %v431 = vpack.c.b16 %v416, %v415
    %v432 = vpack.c.b16 %v418, %v417
    %v433 = vpack.c.b16 %v420, %v419
    %v434 = vpack.c.b16 %v422, %v421
    %v435 = vpack.c.b16 %v424, %v423
    %v436 = vpack.c.b16 %v426, %v425
    %v437 = vpack.c.b16 %v428, %v427
    %v438 = vpack.c.b16 %v430, %v429
    %447 = vmatprep.subr.bf16.mxu0 0
    %448 = vmatpush1.bf16.msra.mxu0 %v431
    %449 = vmatprep.subr.bf16.mxu0 0
    %450 = vmatpush1.bf16.msra.mxu0 %v432
    %451 = vmatprep.subr.bf16.mxu0 0
    %452 = vmatpush1.bf16.msra.mxu0 %v433
    %453 = vmatprep.subr.bf16.mxu0 0
    %454 = vmatpush1.bf16.msra.mxu0 %v434
    %455 = vmatprep.subr.bf16.mxu0 0
    %456 = vmatpush1.bf16.msra.mxu0 %v435
    %457 = vmatprep.subr.bf16.mxu0 0
    %458 = vmatpush1.bf16.msra.mxu0 %v436
    %459 = vmatprep.subr.bf16.mxu0 0
    %460 = vmatpush1.bf16.msra.mxu0 %v437
    %461 = vmatprep.subr.bf16.mxu0 0
    %462 = vmatpush1.bf16.msra.mxu0 %v438
    %463 = vmatprep.subr.bf16.mxu0 0
    %464 = vmatpush1.bf16.msra.mxu0 0
    %465 = vmatprep.subr.bf16.mxu0 0
    %466 = vmatpush1.bf16.msra.mxu0 0
    %467 = vmatprep.subr.bf16.mxu0 0
    %468 = vmatpush1.bf16.msra.mxu0 0
    %469 = vmatprep.subr.bf16.mxu0 0
    %470 = vmatpush1.bf16.msra.mxu0 0
    %471 = vmatprep.subr.bf16.mxu0 0
    %472 = vmatpush1.bf16.msra.mxu0 0
    %473 = vmatprep.subr.bf16.mxu0 0
    %474 = vmatpush1.bf16.msra.mxu0 0
    %475 = vmatprep.subr.bf16.mxu0 0
    %476 = vmatpush1.bf16.msra.mxu0 0
    %477 = vmatprep.subr.bf16.mxu0 0
    %478 = vmatpush1.bf16.msra.mxu0 0
    %479 = vmatprep.mubr.bf16.mxu0 0
    %480 = vmatmul.mubr.bf16.gmra.mrb[0].mxu0 %v392
    %v481 = vpop.f32.mrb[0].mxu0
    %v482 = vadd.f32 %v397, %v481
    %v483 = vpop.f32.mrb[0].mxu0
    %v484 = vpop.f32.mrb[0].mxu0
    %v485 = vadd.f32 %v397, %v484
    %v486 = vpop.f32.mrb[0].mxu0
    %487 = vdwg.mxu0
    %v488 = vadd.f32 %v257, %v482
    %v489 = vadd.f32 %v258, %v485
    %v490 = vld [vmem:[%s5] sm:$0x1]
    %v491 = vld [vmem:[%s6] sm:$0x1]
    %v492 = vsel %vm52, %v488, 0.0
    %493 = vadd.xlane.f32.xlu0 %v492
    %v494 = vpop.xlane.xlu0 %493
    %v495 = vsel %vm52, %v489, 0.0
    %496 = vadd.xlane.f32.xlu0 %v495
    %v497 = vpop.xlane.xlu0 %496
    %v498 = vmul.f32 %v494, %v59
    %v499 = vmul.f32 %v497, %v59
    %v500 = vsub.f32 %v488, %v498
    %v501 = vsub.f32 %v489, %v499
    %v502 = vmul.f32 %v500, %v500
    %v503 = vmul.f32 %v501, %v501
    %v504 = vsel %vm52, %v502, 0.0
    %505 = vadd.xlane.f32.xlu0 %v504
    %v506 = vpop.xlane.xlu0 %505
    %v507 = vsel %vm52, %v503, 0.0
    %508 = vadd.xlane.f32.xlu0 %v507
    %v509 = vpop.xlane.xlu0 %508
    %v510 = vmul.f32 %v506, %v59
    %v511 = vmul.f32 %v509, %v59
    %v512 = vadd.f32 %v510, 1e-05
    %v513 = vadd.f32 %v511, 1e-05
    %v514 = vrsqrt.pop %v512
    %v515 = vrsqrt.pop %v513
    %v516 = vmul.f32 %v500, %v514
    %v517 = vmul.f32 %v501, %v515
    %v519 = vlaneseq
    %v520 = vshrl.u32 %v519, 7
    %v521 = vsub.s32 0, %v520
    %v522 = vrot.slane %v490, %v521
    %v524 = vmul.f32 %v516, %v522
    %v525 = vmul.f32 %v517, %v522
    %v527 = vlaneseq
    %v528 = vshrl.u32 %v527, 7
    %v529 = vsub.s32 0, %v528
    %v530 = vrot.slane %v491, %v529
    %v532 = vadd.f32 %v524, %v530
    %v533 = vadd.f32 %v525, %v530
    %v534 = vmul.f32 %v28, 0.75
    %v535 = vmul.f32 %v29, 0.75
    %v536 = vmul.f32 %v532, 0.25
    %v537 = vmul.f32 %v533, 0.25
    %v538 = vadd.f32 %v534, %v536
    %v539 = vadd.f32 %v535, %v537
    %540 = vst.msk [vmem:[#allocation2] sm:$0xff] %vm52, %v538
    %541 = vst.msk [vmem:[#allocation2 + $0x8] sm:$0xff] %vm52, %v539
    // Predicated region
    $region30: #{tpu_custom_call.1} parent=1 // pred_check
      _
    $region31: #{tpu_custom_call.1} parent=1 // pred_check_branch
      %543 = sbr.rel (0) target = $region33
    $region32: #{tpu_custom_call.1} parent=1 // pred_region
      %s545 = ssub.s32 256, 256
      %546 = vsyncadd [#allocation3], %s545
      %s547 = sshll.u32 [#allocation2], 4
      %s548 = int_to_ptr.vmem [resolvable:$true] %s547
      %553 = dma.vmem_to_hbm [thread:$0]  %s548, 256, %s7, [#allocation3], 128, 128, 8
    $region33: #{tpu_custom_call.1} parent=1 // pred_fallthru
      _
    // Predicated region
    $region34: #{tpu_custom_call.1} parent=1 // pred_check
      _
    $region35: #{tpu_custom_call.1} parent=1 // pred_check_branch
      %555 = sbr.rel (0) target = $region37
    $region36: #{tpu_custom_call.1} parent=1 // pred_region
      %556 = dma.done [#allocation3], 256
    $region37: #{tpu_custom_call.1} parent=1 // pred_fallthru
      _
    %557 = vsyncpa [#allocation3], 1

</llo_original>
